<compile_context>
chip_gen: v7x
topology: tpu7x:2x2x1
jax: 0.10.0
libtpu: 0.0.40
codegen_flags: <defaults>
</compile_context>

<pallas_src>
import functools
import math

import jax
import jax.numpy as jnp
from jax.experimental import pallas as pl
from jax.experimental.pallas import tpu as pltpu


# ---------------------------------------------------------------------------
# small helpers
# ---------------------------------------------------------------------------

def _round_up(x, m):
    return ((x + m - 1) // m) * m


def _pad2(x, rows, cols):
    pr, pc = rows - x.shape[0], cols - x.shape[1]
    if pr or pc:
        x = jnp.pad(x, ((0, pr), (0, pc)))
    return x


def _tile_of(dim, prefs):
    """Largest preferred tile that divides an (already padded) dim, else full."""
    for t in prefs:
        if t <= dim and dim % t == 0:
            return t
    return dim


# ---------------------------------------------------------------------------
# Pallas kernels
# ---------------------------------------------------------------------------

def _make_linear_kernel(has_ln, has_gelu, has_res, k_actual):
    """out = [gelu]( LN?(x) @ W + b ) [+ residual]   — full K per block."""
    inv_k = 1.0 / float(k_actual)

    def kernel(*refs):
        i = 0
        x_ref = refs[i]; i += 1
        if has_ln:
            g_ref, beta_ref = refs[i], refs[i + 1]; i += 2
        w_ref, bias_ref = refs[i], refs[i + 1]; i += 2
        if has_res:
            r_ref = refs[i]; i += 1
        o_ref = refs[i]

        x = x_ref[...]
        if has_ln:
            x = x.astype(jnp.float32)
            # padded K columns are zero and gamma/beta are zero-padded, so
            # dividing by the logical K keeps the statistics exact.
            mu = jnp.sum(x, axis=-1, keepdims=True) * inv_k
            ex2 = jnp.sum(x * x, axis=-1, keepdims=True) * inv_k
            var = ex2 - mu * mu
            x = (x - mu) * jax.lax.rsqrt(var + 1e-6) * g_ref[...] + beta_ref[...]

        y = jnp.dot(x.astype(jnp.bfloat16), w_ref[...],
                    preferred_element_type=jnp.float32) + bias_ref[...]
        if has_gelu:
            y = jax.nn.gelu(y, approximate=True)
        if has_res:
            y = y + r_ref[...].astype(jnp.float32)
        o_ref[...] = y.astype(o_ref.dtype)

    return kernel


def _attn_kernel(q_ref, kv_ref, o_ref, *, nh, dh, d, s_actual):
    """One (batch, query-tile) per grid step; heads unrolled on the lane axis.

    q_ref: (1, tq, D) bf16 (1/sqrt(dh) already folded into the q projection)
    kv_ref: (1, S_pad, 3D) bf16 (q|k|v packed on the lane axis)
    """
    qt = q_ref[0]                             # (tq, D)
    kv = kv_ref[0]                            # (S_pad, 3D)
    tq, s_pad = qt.shape[0], kv.shape[0]

    if s_actual < s_pad:                      # mask padded key columns
        key_mask = jax.lax.broadcasted_iota(jnp.int32, (tq, s_pad), 1) < s_actual

    # TODO(synk): process head pairs together so the score matmul contracts
    # over 128 instead of dh=64 on 256-deep MXU generations (v6e/v7x).
    outs = []
    for h in range(nh):                       # static unroll over heads
        qh = qt[:, h * dh:(h + 1) * dh]
        kh = kv[:, d + h * dh: d + (h + 1) * dh]
        vh = kv[:, 2 * d + h * dh: 2 * d + (h + 1) * dh]
        s = jax.lax.dot_general(qh, kh, (((1,), (1,)), ((), ())),
                                preferred_element_type=jnp.float32)   # (tq, S_pad)
        if s_actual < s_pad:
            s = jnp.where(key_mask, s, -1e30)
        s = s - jnp.max(s, axis=-1, keepdims=True)
        e = jnp.exp(s)
        # approx reciprocal: ~1e-3 rel. error vs exact softmax; within tolerance.
        p = e * pl.reciprocal(jnp.sum(e, axis=-1, keepdims=True), approx=True)
        outs.append(jnp.dot(p.astype(vh.dtype), vh,
                            preferred_element_type=jnp.float32))      # (tq, dh)
    o_ref[0] = jnp.concatenate(outs, axis=-1).astype(o_ref.dtype)     # lane-dense


# ---------------------------------------------------------------------------
# Pallas wrappers
# ---------------------------------------------------------------------------

def fused_linear(x, w_p, b_p, *, n_out, ln=None, gelu=False, residual=None,
                 out_dtype=jnp.float32):
    """y = [gelu](LN?(x) @ w_p + b_p) [+ residual], sliced back to (M, n_out).

    w_p: pre-padded bf16 (Kp, Np); b_p: pre-padded f32 (1, Np);
    ln: optional (gamma, beta), each pre-padded f32 (1, Kp).
    Grid is (M/tm, N/tn) with full-extent K blocks — no accumulator revisit.
    """
    M, K = x.shape
    Kp, Np = w_p.shape
    m_align = 16 if x.dtype == jnp.bfloat16 else 8      # bf16 packs 16 sublanes
    Mp = _round_up(M, m_align)
    tm = _tile_of(Mp, (256, 128))
    tn = _tile_of(Np, (512, 256, 128))

    xp = _pad2(x, Mp, Kp)
    args = [xp]
    in_specs = [pl.BlockSpec((tm, Kp), lambda i, j: (i, 0))]
    if ln is not None:
        g_p, beta_p = ln
        args += [g_p, beta_p]
        in_specs += [pl.BlockSpec((1, Kp), lambda i, j: (0, 0)),
                     pl.BlockSpec((1, Kp), lambda i, j: (0, 0))]
    args += [w_p, b_p]
    in_specs += [pl.BlockSpec((Kp, tn), lambda i, j: (0, j)),
                 pl.BlockSpec((1, tn), lambda i, j: (0, j))]
    if residual is not None:
        args.append(_pad2(residual.astype(jnp.float32), Mp, Np))
        in_specs.append(pl.BlockSpec((tm, tn), lambda i, j: (i, j)))

    kernel = _make_linear_kernel(ln is not None, gelu, residual is not None, K)

    flops = 2 * Mp * Kp * Np
    trans = Mp * Np if gelu else 0
    bytes_accessed = (xp.size * xp.dtype.itemsize + w_p.size * 2 + b_p.size * 4
                      + Mp * Np * jnp.dtype(out_dtype).itemsize
                      + (Mp * Np * 4 if residual is not None else 0))

    out = pl.pallas_call(
        kernel,
        out_shape=jax.ShapeDtypeStruct((Mp, Np), out_dtype),
        grid=(Mp // tm, Np // tn),
        in_specs=in_specs,
        out_specs=pl.BlockSpec((tm, tn), lambda i, j: (i, j)),
        compiler_params=pltpu.CompilerParams(
            dimension_semantics=("parallel", "parallel"),
            vmem_limit_bytes=40 * 1024 * 1024),       # safe on v7x's 64 MiB VMEM
        cost_estimate=pl.CostEstimate(flops=int(flops), transcendentals=int(trans),
                                      bytes_accessed=int(bytes_accessed)),
    )(*args)
    return out[:M, :n_out]


def pallas_mha(qkv, *, nh, dh, s_actual):
    """qkv: (B, S_pad, 3D) bf16 with q|k|v on the lane axis -> (B, S_pad, D) bf16."""
    B, S_pad, D3 = qkv.shape
    D = nh * dh
    tq = _tile_of(S_pad, (256, 128))          # q-row tiling bounds vreg pressure
    kernel = functools.partial(_attn_kernel, nh=nh, dh=dh, d=D, s_actual=s_actual)
    flops = 4 * B * nh * S_pad * S_pad * dh
    bytes_accessed = qkv.size * 2 * 2 + B * S_pad * D * 2
    return pl.pallas_call(
        kernel,
        out_shape=jax.ShapeDtypeStruct((B, S_pad, D), jnp.bfloat16),
        grid=(B, S_pad // tq),
        in_specs=[pl.BlockSpec((1, tq, D), lambda b, qi: (b, qi, 0)),      # q tile
                  pl.BlockSpec((1, S_pad, D3), lambda b, qi: (b, 0, 0))],  # full k|v
        out_specs=pl.BlockSpec((1, tq, D), lambda b, qi: (b, qi, 0)),
        compiler_params=pltpu.CompilerParams(
            dimension_semantics=("parallel", "parallel"),
            vmem_limit_bytes=32 * 1024 * 1024),
        cost_estimate=pl.CostEstimate(flops=int(flops),
                                      transcendentals=int(B * nh * S_pad * S_pad),
                                      bytes_accessed=int(bytes_accessed)),
    )(qkv, qkv)


# ---------------------------------------------------------------------------
# pure-JAX reference (mirrors the kernel math so tolerances stay tight)
# ---------------------------------------------------------------------------

def _ref_linear(x, w_p, b_p, *, n_out, ln=None, gelu=False, residual=None,
                out_dtype=jnp.float32):
    K = x.shape[1]
    x32 = x.astype(jnp.float32)
    if ln is not None:
        g_p, beta_p = ln
        mu = jnp.mean(x32, axis=-1, keepdims=True)
        var = jnp.mean((x32 - mu) ** 2, axis=-1, keepdims=True)
        x32 = (x32 - mu) * jax.lax.rsqrt(var + 1e-6) * g_p[0, :K] + beta_p[0, :K]
    y = jnp.dot(x32.astype(jnp.bfloat16), w_p[:K, :n_out],
                preferred_element_type=jnp.float32) + b_p[0, :n_out]
    if gelu:
        y = jax.nn.gelu(y, approximate=True)
    if residual is not None:
        y = y + residual.astype(jnp.float32)
    return y.astype(out_dtype)


def _ref_mha(qkv, *, nh, dh, s_actual):
    B, S_pad, _ = qkv.shape
    D = nh * dh
    q = qkv[..., 0:D].reshape(B, S_pad, nh, dh)
    k = qkv[..., D:2 * D].reshape(B, S_pad, nh, dh)
    v = qkv[..., 2 * D:3 * D].reshape(B, S_pad, nh, dh)
    s = jnp.einsum("bqhd,bkhd->bhqk", q, k, preferred_element_type=jnp.float32)
    mask = (jnp.arange(S_pad) < s_actual)[None, None, None, :]
    s = jnp.where(mask, s, -1e30)
    p = jax.nn.softmax(s, axis=-1)
    o = jnp.einsum("bhqk,bkhd->bqhd", p.astype(qkv.dtype), v,
                   preferred_element_type=jnp.float32)
    return o.reshape(B, S_pad, D).astype(jnp.bfloat16)


# ---------------------------------------------------------------------------
# one-time weight preparation (LoRA merge, scale fold, bf16 cast, padding)
# ---------------------------------------------------------------------------

def _prep_wb(w, b):
    K, N = w.shape
    Kp, Np = _round_up(K, 128), _round_up(N, 128)
    return (_pad2(w, Kp, Np).astype(jnp.bfloat16),
            _pad2(b.astype(jnp.float32).reshape(1, N), 1, Np))


def _prep_gb(g, b):
    K = g.shape[0]
    Kp = _round_up(K, 128)
    return (_pad2(g.astype(jnp.float32).reshape(1, K), 1, Kp),
            _pad2(b.astype(jnp.float32).reshape(1, K), 1, Kp))


def prepare_params(params, cfg):
    """Called ONCE: merge LoRA into W (exact in f32), fold 1/sqrt(dh) into the
    q columns, cast to bf16 and pad.  The jitted forward does no weight prep."""
    D, nh = cfg["dim"], cfg["heads"]
    dh = D // nh
    q_scale = 1.0 / math.sqrt(dh)
    lora_scale = float(cfg["alpha"] // cfg["r"])      # integer floor-div, as in PyTorch

    prep = {"cls": params["cls"], "pos": params["pos"]}
    prep["patch_w"], prep["patch_b"] = _prep_wb(params["patch_w"], params["patch_b"])
    prep["ln_g"], prep["ln_b"] = _prep_gb(params["ln_g"], params["ln_b"])
    prep["fc_w"], prep["fc_b"] = _prep_wb(params["fc_w"], params["fc_b"])

    blocks = []
    for blk in params["blocks"]:
        wq_eff = blk["wq"] + lora_scale * (blk["aq"] @ blk["bbq"])
        wv_eff = blk["wv"] + lora_scale * (blk["av"] @ blk["bbv"])
        w_qkv = jnp.concatenate([wq_eff * q_scale, blk["wk"], wv_eff], axis=1)
        b_qkv = jnp.concatenate([blk["bq"] * q_scale, blk["bk"], blk["bv"]])
        pb = {}
        pb["ln1_g"], pb["ln1_b"] = _prep_gb(blk["ln1_g"], blk["ln1_b"])
        pb["ln2_g"], pb["ln2_b"] = _prep_gb(blk["ln2_g"], blk["ln2_b"])
        pb["w_qkv"], pb["b_qkv"] = _prep_wb(w_qkv, b_qkv)
        pb["wo"], pb["bo"] = _prep_wb(blk["wo"], blk["bo"])
        pb["w1"], pb["b1"] = _prep_wb(blk["w1"], blk["b1"])
        pb["w2"], pb["b2"] = _prep_wb(blk["w2"], blk["b2"])
        blocks.append(pb)
    prep["blocks"] = blocks
    return prep


# ---------------------------------------------------------------------------
# forward pass
# ---------------------------------------------------------------------------

def lora_vit_forward(x, prep, cfg, use_pallas=True):
    B, C, H, W = x.shape
    P, D, nh = cfg["patch"], cfg["dim"], cfg["heads"]
    dh = D // nh
    gh, gw = H // P, W // P

    lin = fused_linear if use_pallas else _ref_linear
    mha = pallas_mha if use_pallas else _ref_mha

    # patch embedding: Conv2d(C, D, kernel=P, stride=P) == patch-flatten + matmul
    patches = (x.reshape(B, C, gh, P, gw, P)
                 .transpose(0, 2, 4, 1, 3, 5)
                 .reshape(B * gh * gw, C * P * P))
    tok = lin(patches, prep["patch_w"], prep["patch_b"], n_out=D).reshape(B, gh * gw, D)

    cls = jnp.broadcast_to(prep["cls"], (B, 1, D))
    h = jnp.concatenate([cls, tok], axis=1) + prep["pos"]
    S = h.shape[1]
    # pad the sequence ONCE; padded key columns are masked inside attention and
    # only the cls row is read at the end, so padded rows never leak.
    S_pad = _round_up(S, 128) if S >= 128 else _round_up(S, 8)
    if S_pad != S:
        h = jnp.pad(h, ((0, 0), (0, S_pad - S), (0, 0)))
    M = B * S_pad

    for blk in prep["blocks"]:
        hf = h.reshape(M, D)
        # LN1 + fused(LoRA-merged, q-scaled) q/k/v projection  -> bf16
        qkv = lin(hf, blk["w_qkv"], blk["b_qkv"], n_out=3 * D,
                  ln=(blk["ln1_g"], blk["ln1_b"]), out_dtype=jnp.bfloat16)
        attn = mha(qkv.reshape(B, S_pad, 3 * D), nh=nh, dh=dh, s_actual=S)
        # output projection with fused residual add -> new f32 residual stream
        h = lin(attn.reshape(M, D), blk["wo"], blk["bo"], n_out=D,
                residual=hf).reshape(B, S_pad, D)

        hf = h.reshape(M, D)
        # LN2 + fc1 + fused GELU -> bf16
        g = lin(hf, blk["w1"], blk["b1"], n_out=cfg["ff"],
                ln=(blk["ln2_g"], blk["ln2_b"]), gelu=True, out_dtype=jnp.bfloat16)
        # fc2 with fused residual add
        h = lin(g, blk["w2"], blk["b2"], n_out=D, residual=hf).reshape(B, S_pad, D)

    cls_tok = h[:, 0]                                   # (B, D)
    # final LN fused into the classification head
    return lin(cls_tok, prep["fc_w"], prep["fc_b"], n_out=cfg["classes"],
               ln=(prep["ln_g"], prep["ln_b"]))


# ---------------------------------------------------------------------------
# deterministic parameter construction
# ---------------------------------------------------------------------------

def make_params(key, cfg):
    C, P, D, FF, r, L, NC = (cfg["chans"], cfg["patch"], cfg["dim"],
                             cfg["ff"], cfg["r"], cfg["layers"], cfg["classes"])
    S = (cfg["img"] // P) ** 2 + 1

    def nrm(k, shape, scale=0.02):
        return scale * jax.random.normal(k, shape, dtype=jnp.float32)

    keys = iter(jax.random.split(key, 16 + 32 * L))
    params = {
        "patch_w": nrm(next(keys), (C * P * P, D)),
        "patch_b": nrm(next(keys), (D,)),
        "cls": nrm(next(keys), (1, 1, D)),
        "pos": nrm(next(keys), (1, S, D)),
        "ln_g": jnp.ones((D,), jnp.float32),
        "ln_b": jnp.zeros((D,), jnp.float32),
        "fc_w": nrm(next(keys), (D, NC)),
        "fc_b": nrm(next(keys), (NC,)),
        "blocks": [],
    }
    for _ in range(L):
        blk = {
            "ln1_g": jnp.ones((D,), jnp.float32), "ln1_b": jnp.zeros((D,), jnp.float32),
            "ln2_g": jnp.ones((D,), jnp.float32), "ln2_b": jnp.zeros((D,), jnp.float32),
            "wq": nrm(next(keys), (D, D)), "bq": nrm(next(keys), (D,)),
            "wk": nrm(next(keys), (D, D)), "bk": nrm(next(keys), (D,)),
            "wv": nrm(next(keys), (D, D)), "bv": nrm(next(keys), (D,)),
            "wo": nrm(next(keys), (D, D)), "bo": nrm(next(keys), (D,)),
            "w1": nrm(next(keys), (D, FF)), "b1": nrm(next(keys), (FF,)),
            "w2": nrm(next(keys), (FF, D)), "b2": nrm(next(keys), (D,)),
            # LoRA A (kaiming-uniform in the module) and B.  The module zero-inits
            # w_B; small random values here so the LoRA path is actually exercised.
            "aq": nrm(next(keys), (D, r)), "bbq": nrm(next(keys), (r, D)),
            "av": nrm(next(keys), (D, r)), "bbv": nrm(next(keys), (r, D)),
        }
        params["blocks"].append(blk)
    return params


# ---------------------------------------------------------------------------
# main
# ---------------------------------------------------------------------------

if __name__ == "__main__":
    cfg = dict(img=16, chans=3, patch=8, dim=128, heads=2, ff=256,
               layers=2, r=4, alpha=8, classes=10)

    key = jax.random.PRNGKey(0)
    kx, kp = jax.random.split(key)
    x = jax.random.normal(kx, (2, cfg["chans"], cfg["img"], cfg["img"]),
                          dtype=jnp.float32)           # NCHW, like the PyTorch module
    params = make_params(kp, cfg)
    prep = prepare_params(params, cfg)                 # once, outside the jitted fwd

    fwd = jax.jit(functools.partial(lora_vit_forward, cfg=cfg, use_pallas=True))
    out = jax.block_until_ready(fwd(x, prep))

    # correctness sanity-check against a pure-JAX mirror of the same math
    ref = jax.block_until_ready(lora_vit_forward(x, prep, cfg, use_pallas=False))
    assert out.shape == (2, cfg["classes"])
    assert jnp.allclose(out, ref, rtol=2e-2, atol=2e-2), "Pallas output mismatch"

    print("KERNEL_OK")
</pallas_src>

<mosaic_0001>
module attributes {stable_mosaic.version = 11 : i64} {
  func.func @kernel(%arg0: i32, %arg1: i32, %arg2: memref<8x256xf32, #tpu.memory_space<vmem>>, %arg3: memref<256x128xbf16, #tpu.memory_space<vmem>>, %arg4: memref<1x128xf32, #tpu.memory_space<vmem>>, %arg5: memref<8x128xf32, #tpu.memory_space<vmem>>) attributes {dimension_semantics = [#tpu.dimension_semantics<parallel>, #tpu.dimension_semantics<parallel>], iteration_bounds = array<i64: 1, 1>, scalar_prefetch = 0 : i64, scratch_operands = 0 : i64, tpu.core_type = #tpu.core_type<tc>, window_params = [{transform_indices = @transform_0, window_bounds = array<i64: 8, 256>}, {transform_indices = @transform_1, window_bounds = array<i64: 256, 128>}, {transform_indices = @transform_2, window_bounds = array<i64: 1, 128>}, {transform_indices = @transform_3, window_bounds = array<i64: 8, 128>}]} {
    %c0 = arith.constant 0 : index
    %c0_0 = arith.constant 0 : index
    %0 = vector.load %arg2[%c0, %c0_0] : memref<8x256xf32, #tpu.memory_space<vmem>>, vector<8x256xf32>
    %1 = arith.truncf %0 : vector<8x256xf32> to vector<8x256xbf16>
    %c0_1 = arith.constant 0 : index
    %c0_2 = arith.constant 0 : index
    %2 = vector.load %arg3[%c0_1, %c0_2] : memref<256x128xbf16, #tpu.memory_space<vmem>>, vector<256x128xbf16>
    %cst = arith.constant dense<0.000000e+00> : vector<8x128xf32>
    %3 = tpu.matmul %1, %2, %cst {dimension_numbers = #tpu.dot_dimension_numbers<[1], [0], [0], [1], [0, 0, 1, 1], [], []>} : vector<8x256xbf16>, vector<256x128xbf16>, vector<8x128xf32> -> vector<8x128xf32>
    %c0_3 = arith.constant 0 : index
    %c0_4 = arith.constant 0 : index
    %4 = vector.load %arg4[%c0_3, %c0_4] : memref<1x128xf32, #tpu.memory_space<vmem>>, vector<1x128xf32>
    %5 = vector.broadcast %4 : vector<1x128xf32> to vector<8x128xf32>
    %6 = arith.addf %3, %5 : vector<8x128xf32>
    %c0_5 = arith.constant 0 : index
    %c0_6 = arith.constant 0 : index
    %7 = vector.load %arg5[%c0_5, %c0_6] : memref<8x128xf32, #tpu.memory_space<vmem>>, vector<8x128xf32>
    tpu.vector_store %arg5[%c0_5, %c0_6], %6 {strides = array<i32>} : memref<8x128xf32, #tpu.memory_space<vmem>>, vector<8x128xf32>,
    return
  }
  func.func @transform_0(%arg0: i32, %arg1: i32) -> (i32, i32) {
    %c0_i32 = arith.constant 0 : i32
    %c0_i32_0 = arith.constant 0 : i32
    return %arg0, %c0_i32 : i32, i32
  }
  func.func @transform_1(%arg0: i32, %arg1: i32) -> (i32, i32) {
    %c0_i32 = arith.constant 0 : i32
    %c0_i32_0 = arith.constant 0 : i32
    return %c0_i32, %arg1 : i32, i32
  }
  func.func @transform_2(%arg0: i32, %arg1: i32) -> (i32, i32) {
    %c0_i32 = arith.constant 0 : i32
    %c0_i32_0 = arith.constant 0 : i32
    return %c0_i32, %arg1 : i32, i32
  }
  func.func @transform_3(%arg0: i32, %arg1: i32) -> (i32, i32) {
    %c0_i32 = arith.constant 0 : i32
    return %arg0, %arg1 : i32, i32
  }
}

module attributes {stable_mosaic.version = 11 : i64} {
  func.func @_attn_kernel(%arg0: i32, %arg1: i32, %arg2: memref<1x8x128xbf16, #tpu.memory_space<vmem>>, %arg3: memref<1x8x384xbf16, #tpu.memory_space<vmem>>, %arg4: memref<1x8x128xbf16, #tpu.memory_space<vmem>>) attributes {dimension_semantics = [#tpu.dimension_semantics<parallel>, #tpu.dimension_semantics<parallel>], iteration_bounds = array<i64: 2, 1>, scalar_prefetch = 0 : i64, scratch_operands = 0 : i64, tpu.core_type = #tpu.core_type<tc>, window_params = [{transform_indices = @transform_0, window_bounds = array<i64: 1, 8, 128>}, {transform_indices = @transform_1, window_bounds = array<i64: 1, 8, 384>}, {transform_indices = @transform_2, window_bounds = array<i64: 1, 8, 128>}]} {
    %c0 = arith.constant 0 : index
    %c0_0 = arith.constant 0 : index
    %c0_1 = arith.constant 0 : index
    %0 = vector.load %arg2[%c0, %c0_0, %c0_1] : memref<1x8x128xbf16, #tpu.memory_space<vmem>>, vector<1x8x128xbf16>
    %1 = vector.shape_cast %0 : vector<1x8x128xbf16> to vector<8x128xbf16>
    %c0_2 = arith.constant 0 : index
    %c0_3 = arith.constant 0 : index
    %c0_4 = arith.constant 0 : index
    %2 = vector.load %arg3[%c0_2, %c0_3, %c0_4] : memref<1x8x384xbf16, #tpu.memory_space<vmem>>, vector<1x8x384xbf16>
    %3 = vector.shape_cast %2 : vector<1x8x384xbf16> to vector<8x384xbf16>
    %4 = tpu.iota {dimensions = array<i32: 1>} : vector<8x8xi32>
    %c5_i32 = arith.constant 5 : i32
    %5 = vector.broadcast %c5_i32 : i32 to vector<8x8xi32>
    %6 = arith.cmpi slt, %4, %5 : vector<8x8xi32>
    %7 = vector.extract_strided_slice %1 {offsets = [0, 0], sizes = [8, 64], strides = [1, 1]} : vector<8x128xbf16> to vector<8x64xbf16>
    %8 = vector.extract_strided_slice %3 {offsets = [0, 128], sizes = [8, 64], strides = [1, 1]} : vector<8x384xbf16> to vector<8x64xbf16>
    %9 = vector.extract_strided_slice %3 {offsets = [0, 256], sizes = [8, 64], strides = [1, 1]} : vector<8x384xbf16> to vector<8x64xbf16>
    %cst = arith.constant dense<0.000000e+00> : vector<8x8xf32>
    %10 = tpu.matmul %7, %8, %cst {dimension_numbers = #tpu.dot_dimension_numbers<[1], [1], [0], [0], [0, 0, 1, 0], [], []>} : vector<8x64xbf16>, vector<8x64xbf16>, vector<8x8xf32> -> vector<8x8xf32>
    %cst_5 = arith.constant -1.000000e+30 : f32
    %11 = vector.broadcast %cst_5 : f32 to vector<8x8xf32>
    %12 = arith.select %6, %10, %11 : vector<8x8xi1>, vector<8x8xf32>
    %cst_6 = arith.constant dense<0xFF800000> : vector<8xf32>
    %13 = vector.multi_reduction <maximumf>, %12, %cst_6 [1] : vector<8x8xf32> to vector<8xf32>
    %14 = vector.shape_cast %13 : vector<8xf32> to vector<8x1xf32>
    %15 = vector.broadcast %14 : vector<8x1xf32> to vector<8x8xf32>
    %16 = arith.subf %12, %15 : vector<8x8xf32>
    %17 = math.exp %16 : vector<8x8xf32>
    %cst_7 = arith.constant dense<0.000000e+00> : vector<8xf32>
    %18 = vector.multi_reduction <add>, %17, %cst_7 [1] : vector<8x8xf32> to vector<8xf32>
    %19 = vector.shape_cast %18 : vector<8xf32> to vector<8x1xf32>
    %20 = tpu.reciprocal %19 {approx = true} : vector<8x1xf32> -> vector<8x1xf32>
    %21 = vector.broadcast %20 : vector<8x1xf32> to vector<8x8xf32>
    %22 = arith.mulf %17, %21 : vector<8x8xf32>
    %23 = arith.truncf %22 : vector<8x8xf32> to vector<8x8xbf16>
    %cst_8 = arith.constant dense<0.000000e+00> : vector<8x64xf32>
    %24 = tpu.matmul %23, %9, %cst_8 {dimension_numbers = #tpu.dot_dimension_numbers<[1], [0], [0], [1], [0, 0, 1, 1], [], []>} : vector<8x8xbf16>, vector<8x64xbf16>, vector<8x64xf32> -> vector<8x64xf32>
    %25 = vector.extract_strided_slice %1 {offsets = [0, 64], sizes = [8, 64], strides = [1, 1]} : vector<8x128xbf16> to vector<8x64xbf16>
    %26 = vector.extract_strided_slice %3 {offsets = [0, 192], sizes = [8, 64], strides = [1, 1]} : vector<8x384xbf16> to vector<8x64xbf16>
    %27 = vector.extract_strided_slice %3 {offsets = [0, 320], sizes = [8, 64], strides = [1, 1]} : vector<8x384xbf16> to vector<8x64xbf16>
    %cst_9 = arith.constant dense<0.000000e+00> : vector<8x8xf32>
    %28 = tpu.matmul %25, %26, %cst_9 {dimension_numbers = #tpu.dot_dimension_numbers<[1], [1], [0], [0], [0, 0, 1, 0], [], []>} : vector<8x64xbf16>, vector<8x64xbf16>, vector<8x8xf32> -> vector<8x8xf32>
    %cst_10 = arith.constant -1.000000e+30 : f32
    %29 = vector.broadcast %cst_10 : f32 to vector<8x8xf32>
    %30 = arith.select %6, %28, %29 : vector<8x8xi1>, vector<8x8xf32>
    %cst_11 = arith.constant dense<0xFF800000> : vector<8xf32>
    %31 = vector.multi_reduction <maximumf>, %30, %cst_11 [1] : vector<8x8xf32> to vector<8xf32>
    %32 = vector.shape_cast %31 : vector<8xf32> to vector<8x1xf32>
    %33 = vector.broadcast %32 : vector<8x1xf32> to vector<8x8xf32>
    %34 = arith.subf %30, %33 : vector<8x8xf32>
    %35 = math.exp %34 : vector<8x8xf32>
    %cst_12 = arith.constant dense<0.000000e+00> : vector<8xf32>
    %36 = vector.multi_reduction <add>, %35, %cst_12 [1] : vector<8x8xf32> to vector<8xf32>
    %37 = vector.shape_cast %36 : vector<8xf32> to vector<8x1xf32>
    %38 = tpu.reciprocal %37 {approx = true} : vector<8x1xf32> -> vector<8x1xf32>
    %39 = vector.broadcast %38 : vector<8x1xf32> to vector<8x8xf32>
    %40 = arith.mulf %35, %39 : vector<8x8xf32>
    %41 = arith.truncf %40 : vector<8x8xf32> to vector<8x8xbf16>
    %cst_13 = arith.constant dense<0.000000e+00> : vector<8x64xf32>
    %42 = tpu.matmul %41, %27, %cst_13 {dimension_numbers = #tpu.dot_dimension_numbers<[1], [0], [0], [1], [0, 0, 1, 1], [], []>} : vector<8x8xbf16>, vector<8x64xbf16>, vector<8x64xf32> -> vector<8x64xf32>
    %43 = tpu.concatenate %24, %42 in 1 : vector<8x64xf32>, vector<8x64xf32> -> vector<8x128xf32>
    %44 = arith.truncf %43 : vector<8x128xf32> to vector<8x128xbf16>
    %c0_14 = arith.constant 0 : index
    %c0_15 = arith.constant 0 : index
    %c0_16 = arith.constant 0 : index
    %45 = vector.load %arg4[%c0_14, %c0_15, %c0_16] : memref<1x8x128xbf16, #tpu.memory_space<vmem>>, vector<1x8x128xbf16>
    %46 = vector.shape_cast %45 : vector<1x8x128xbf16> to vector<8x128xbf16>
    %47 = vector.shape_cast %44 : vector<8x128xbf16> to vector<1x8x128xbf16>
    tpu.vector_store %arg4[%c0_14, %c0_15, %c0_16], %47 {strides = array<i32>} : memref<1x8x128xbf16, #tpu.memory_space<vmem>>, vector<1x8x128xbf16>,
    return
  }
  func.func @transform_0(%arg0: i32, %arg1: i32) -> (i32, i32, i32) {
    %c0_i32 = arith.constant 0 : i32
    %c0_i32_0 = arith.constant 0 : i32
    return %arg0, %arg1, %c0_i32 : i32, i32, i32
  }
  func.func @transform_1(%arg0: i32, %arg1: i32) -> (i32, i32, i32) {
    %c0_i32 = arith.constant 0 : i32
    %c0_i32_0 = arith.constant 0 : i32
    %c0_i32_1 = arith.constant 0 : i32
    return %arg0, %c0_i32, %c0_i32_0 : i32, i32, i32
  }
  func.func @transform_2(%arg0: i32, %arg1: i32) -> (i32, i32, i32) {
    %c0_i32 = arith.constant 0 : i32
    %c0_i32_0 = arith.constant 0 : i32
    return %arg0, %arg1, %c0_i32 : i32, i32, i32
  }
}

module attributes {stable_mosaic.version = 11 : i64} {
  func.func @kernel(%arg0: i32, %arg1: i32, %arg2: memref<16x128xbf16, #tpu.memory_space<vmem>>, %arg3: memref<128x128xbf16, #tpu.memory_space<vmem>>, %arg4: memref<1x128xf32, #tpu.memory_space<vmem>>, %arg5: memref<16x128xf32, #tpu.memory_space<vmem>>, %arg6: memref<16x128xf32, #tpu.memory_space<vmem>>) attributes {dimension_semantics = [#tpu.dimension_semantics<parallel>, #tpu.dimension_semantics<parallel>], iteration_bounds = array<i64: 1, 1>, scalar_prefetch = 0 : i64, scratch_operands = 0 : i64, tpu.core_type = #tpu.core_type<tc>, window_params = [{transform_indices = @transform_0, window_bounds = array<i64: 16, 128>}, {transform_indices = @transform_1, window_bounds = array<i64: 128, 128>}, {transform_indices = @transform_2, window_bounds = array<i64: 1, 128>}, {transform_indices = @transform_3, window_bounds = array<i64: 16, 128>}, {transform_indices = @transform_4, window_bounds = array<i64: 16, 128>}]} {
    %c0 = arith.constant 0 : index
    %c0_0 = arith.constant 0 : index
    %0 = vector.load %arg2[%c0, %c0_0] : memref<16x128xbf16, #tpu.memory_space<vmem>>, vector<16x128xbf16>
    %c0_1 = arith.constant 0 : index
    %c0_2 = arith.constant 0 : index
    %1 = vector.load %arg3[%c0_1, %c0_2] : memref<128x128xbf16, #tpu.memory_space<vmem>>, vector<128x128xbf16>
    %cst = arith.constant dense<0.000000e+00> : vector<16x128xf32>
    %2 = tpu.matmul %0, %1, %cst {dimension_numbers = #tpu.dot_dimension_numbers<[1], [0], [0], [1], [0, 0, 1, 1], [], []>} : vector<16x128xbf16>, vector<128x128xbf16>, vector<16x128xf32> -> vector<16x128xf32>
    %c0_3 = arith.constant 0 : index
    %c0_4 = arith.constant 0 : index
    %3 = vector.load %arg4[%c0_3, %c0_4] : memref<1x128xf32, #tpu.memory_space<vmem>>, vector<1x128xf32>
    %4 = vector.broadcast %3 : vector<1x128xf32> to vector<16x128xf32>
    %5 = arith.addf %2, %4 : vector<16x128xf32>
    %c0_5 = arith.constant 0 : index
    %c0_6 = arith.constant 0 : index
    %6 = vector.load %arg5[%c0_5, %c0_6] : memref<16x128xf32, #tpu.memory_space<vmem>>, vector<16x128xf32>
    %7 = arith.addf %5, %6 : vector<16x128xf32>
    %c0_7 = arith.constant 0 : index
    %c0_8 = arith.constant 0 : index
    %8 = vector.load %arg6[%c0_7, %c0_8] : memref<16x128xf32, #tpu.memory_space<vmem>>, vector<16x128xf32>
    tpu.vector_store %arg6[%c0_7, %c0_8], %7 {strides = array<i32>} : memref<16x128xf32, #tpu.memory_space<vmem>>, vector<16x128xf32>,
    return
  }
  func.func @transform_0(%arg0: i32, %arg1: i32) -> (i32, i32) {
    %c0_i32 = arith.constant 0 : i32
    %c0_i32_0 = arith.constant 0 : i32
    return %arg0, %c0_i32 : i32, i32
  }
  func.func @transform_1(%arg0: i32, %arg1: i32) -> (i32, i32) {
    %c0_i32 = arith.constant 0 : i32
    %c0_i32_0 = arith.constant 0 : i32
    return %c0_i32, %arg1 : i32, i32
  }
  func.func @transform_2(%arg0: i32, %arg1: i32) -> (i32, i32) {
    %c0_i32 = arith.constant 0 : i32
    %c0_i32_0 = arith.constant 0 : i32
    return %c0_i32, %arg1 : i32, i32
  }
  func.func @transform_3(%arg0: i32, %arg1: i32) -> (i32, i32) {
    %c0_i32 = arith.constant 0 : i32
    return %arg0, %arg1 : i32, i32
  }
  func.func @transform_4(%arg0: i32, %arg1: i32) -> (i32, i32) {
    %c0_i32 = arith.constant 0 : i32
    return %arg0, %arg1 : i32, i32
  }
}

module attributes {stable_mosaic.version = 11 : i64} {
  func.func @kernel(%arg0: i32, %arg1: i32, %arg2: memref<16x128xf32, #tpu.memory_space<vmem>>, %arg3: memref<1x128xf32, #tpu.memory_space<vmem>>, %arg4: memref<1x128xf32, #tpu.memory_space<vmem>>, %arg5: memref<128x128xbf16, #tpu.memory_space<vmem>>, %arg6: memref<1x128xf32, #tpu.memory_space<vmem>>, %arg7: memref<16x128xbf16, #tpu.memory_space<vmem>>) attributes {dimension_semantics = [#tpu.dimension_semantics<parallel>, #tpu.dimension_semantics<parallel>], iteration_bounds = array<i64: 1, 3>, scalar_prefetch = 0 : i64, scratch_operands = 0 : i64, tpu.core_type = #tpu.core_type<tc>, window_params = [{transform_indices = @transform_0, window_bounds = array<i64: 16, 128>}, {pipeline_mode = #tpu.pipeline_mode<synchronous>, transform_indices = @transform_1, window_bounds = array<i64: 1, 128>}, {pipeline_mode = #tpu.pipeline_mode<synchronous>, transform_indices = @transform_2, window_bounds = array<i64: 1, 128>}, {transform_indices = @transform_3, window_bounds = array<i64: 128, 128>}, {transform_indices = @transform_4, window_bounds = array<i64: 1, 128>}, {transform_indices = @transform_5, window_bounds = array<i64: 16, 128>}]} {
    %c0 = arith.constant 0 : index
    %c0_0 = arith.constant 0 : index
    %0 = vector.load %arg2[%c0, %c0_0] : memref<16x128xf32, #tpu.memory_space<vmem>>, vector<16x128xf32>
    %cst = arith.constant dense<0.000000e+00> : vector<16xf32>
    %1 = vector.multi_reduction <add>, %0, %cst [1] : vector<16x128xf32> to vector<16xf32>
    %2 = vector.shape_cast %1 : vector<16xf32> to vector<16x1xf32>
    %cst_1 = arith.constant 7.812500e-03 : f32
    %3 = vector.broadcast %cst_1 : f32 to vector<16x1xf32>
    %4 = arith.mulf %2, %3 : vector<16x1xf32>
    %5 = arith.mulf %0, %0 : vector<16x128xf32>
    %cst_2 = arith.constant dense<0.000000e+00> : vector<16xf32>
    %6 = vector.multi_reduction <add>, %5, %cst_2 [1] : vector<16x128xf32> to vector<16xf32>
    %7 = vector.shape_cast %6 : vector<16xf32> to vector<16x1xf32>
    %cst_3 = arith.constant 7.812500e-03 : f32
    %8 = vector.broadcast %cst_3 : f32 to vector<16x1xf32>
    %9 = arith.mulf %7, %8 : vector<16x1xf32>
    %10 = arith.mulf %4, %4 : vector<16x1xf32>
    %11 = arith.subf %9, %10 : vector<16x1xf32>
    %12 = vector.broadcast %4 : vector<16x1xf32> to vector<16x128xf32>
    %13 = arith.subf %0, %12 : vector<16x128xf32>
    %cst_4 = arith.constant 9.99999997E-7 : f32
    %14 = vector.broadcast %cst_4 : f32 to vector<16x1xf32>
    %15 = arith.addf %11, %14 : vector<16x1xf32>
    %16 = math.rsqrt %15 : vector<16x1xf32>
    %17 = vector.broadcast %16 : vector<16x1xf32> to vector<16x128xf32>
    %18 = arith.mulf %13, %17 : vector<16x128xf32>
    %c0_5 = arith.constant 0 : index
    %c0_6 = arith.constant 0 : index
    %19 = vector.load %arg3[%c0_5, %c0_6] : memref<1x128xf32, #tpu.memory_space<vmem>>, vector<1x128xf32>
    %20 = vector.broadcast %19 : vector<1x128xf32> to vector<16x128xf32>
    %21 = arith.mulf %18, %20 : vector<16x128xf32>
    %c0_7 = arith.constant 0 : index
    %c0_8 = arith.constant 0 : index
    %22 = vector.load %arg4[%c0_7, %c0_8] : memref<1x128xf32, #tpu.memory_space<vmem>>, vector<1x128xf32>
    %23 = vector.broadcast %22 : vector<1x128xf32> to vector<16x128xf32>
    %24 = arith.addf %21, %23 : vector<16x128xf32>
    %25 = arith.truncf %24 : vector<16x128xf32> to vector<16x128xbf16>
    %c0_9 = arith.constant 0 : index
    %c0_10 = arith.constant 0 : index
    %26 = vector.load %arg5[%c0_9, %c0_10] : memref<128x128xbf16, #tpu.memory_space<vmem>>, vector<128x128xbf16>
    %cst_11 = arith.constant dense<0.000000e+00> : vector<16x128xf32>
    %27 = tpu.matmul %25, %26, %cst_11 {dimension_numbers = #tpu.dot_dimension_numbers<[1], [0], [0], [1], [0, 0, 1, 1], [], []>} : vector<16x128xbf16>, vector<128x128xbf16>, vector<16x128xf32> -> vector<16x128xf32>
    %c0_12 = arith.constant 0 : index
    %c0_13 = arith.constant 0 : index
    %28 = vector.load %arg6[%c0_12, %c0_13] : memref<1x128xf32, #tpu.memory_space<vmem>>, vector<1x128xf32>
    %29 = vector.broadcast %28 : vector<1x128xf32> to vector<16x128xf32>
    %30 = arith.addf %27, %29 : vector<16x128xf32>
    %31 = arith.truncf %30 : vector<16x128xf32> to vector<16x128xbf16>
    %c0_14 = arith.constant 0 : index
    %c0_15 = arith.constant 0 : index
    %32 = vector.load %arg7[%c0_14, %c0_15] : memref<16x128xbf16, #tpu.memory_space<vmem>>, vector<16x128xbf16>
    tpu.vector_store %arg7[%c0_14, %c0_15], %31 {strides = array<i32>} : memref<16x128xbf16, #tpu.memory_space<vmem>>, vector<16x128xbf16>,
    return
  }
  func.func @transform_0(%arg0: i32, %arg1: i32) -> (i32, i32) {
    %c0_i32 = arith.constant 0 : i32
    %c0_i32_0 = arith.constant 0 : i32
    return %arg0, %c0_i32 : i32, i32
  }
  func.func @transform_1(%arg0: i32, %arg1: i32) -> (i32, i32) {
    %c0_i32 = arith.constant 0 : i32
    %c0_i32_0 = arith.constant 0 : i32
    %c0_i32_1 = arith.constant 0 : i32
    return %c0_i32, %c0_i32_0 : i32, i32
  }
  func.func @transform_2(%arg0: i32, %arg1: i32) -> (i32, i32) {
    %c0_i32 = arith.constant 0 : i32
    %c0_i32_0 = arith.constant 0 : i32
    %c0_i32_1 = arith.constant 0 : i32
    return %c0_i32, %c0_i32_0 : i32, i32
  }
  func.func @transform_3(%arg0: i32, %arg1: i32) -> (i32, i32) {
    %c0_i32 = arith.constant 0 : i32
    %c0_i32_0 = arith.constant 0 : i32
    return %c0_i32, %arg1 : i32, i32
  }
  func.func @transform_4(%arg0: i32, %arg1: i32) -> (i32, i32) {
    %c0_i32 = arith.constant 0 : i32
    %c0_i32_0 = arith.constant 0 : i32
    return %c0_i32, %arg1 : i32, i32
  }
  func.func @transform_5(%arg0: i32, %arg1: i32) -> (i32, i32) {
    %c0_i32 = arith.constant 0 : i32
    return %arg0, %arg1 : i32, i32
  }
}

module attributes {stable_mosaic.version = 11 : i64} {
  func.func @kernel(%arg0: i32, %arg1: i32, %arg2: memref<16x128xf32, #tpu.memory_space<vmem>>, %arg3: memref<1x128xf32, #tpu.memory_space<vmem>>, %arg4: memref<1x128xf32, #tpu.memory_space<vmem>>, %arg5: memref<128x256xbf16, #tpu.memory_space<vmem>>, %arg6: memref<1x256xf32, #tpu.memory_space<vmem>>, %arg7: memref<16x256xbf16, #tpu.memory_space<vmem>>) attributes {dimension_semantics = [#tpu.dimension_semantics<parallel>, #tpu.dimension_semantics<parallel>], iteration_bounds = array<i64: 1, 1>, scalar_prefetch = 0 : i64, scratch_operands = 0 : i64, tpu.core_type = #tpu.core_type<tc>, window_params = [{transform_indices = @transform_0, window_bounds = array<i64: 16, 128>}, {pipeline_mode = #tpu.pipeline_mode<synchronous>, transform_indices = @transform_1, window_bounds = array<i64: 1, 128>}, {pipeline_mode = #tpu.pipeline_mode<synchronous>, transform_indices = @transform_2, window_bounds = array<i64: 1, 128>}, {transform_indices = @transform_3, window_bounds = array<i64: 128, 256>}, {transform_indices = @transform_4, window_bounds = array<i64: 1, 256>}, {transform_indices = @transform_5, window_bounds = array<i64: 16, 256>}]} {
    %c0 = arith.constant 0 : index
    %c0_0 = arith.constant 0 : index
    %0 = vector.load %arg2[%c0, %c0_0] : memref<16x128xf32, #tpu.memory_space<vmem>>, vector<16x128xf32>
    %cst = arith.constant dense<0.000000e+00> : vector<16xf32>
    %1 = vector.multi_reduction <add>, %0, %cst [1] : vector<16x128xf32> to vector<16xf32>
    %2 = vector.shape_cast %1 : vector<16xf32> to vector<16x1xf32>
    %cst_1 = arith.constant 7.812500e-03 : f32
    %3 = vector.broadcast %cst_1 : f32 to vector<16x1xf32>
    %4 = arith.mulf %2, %3 : vector<16x1xf32>
    %5 = arith.mulf %0, %0 : vector<16x128xf32>
    %cst_2 = arith.constant dense<0.000000e+00> : vector<16xf32>
    %6 = vector.multi_reduction <add>, %5, %cst_2 [1] : vector<16x128xf32> to vector<16xf32>
    %7 = vector.shape_cast %6 : vector<16xf32> to vector<16x1xf32>
    %cst_3 = arith.constant 7.812500e-03 : f32
    %8 = vector.broadcast %cst_3 : f32 to vector<16x1xf32>
    %9 = arith.mulf %7, %8 : vector<16x1xf32>
    %10 = arith.mulf %4, %4 : vector<16x1xf32>
    %11 = arith.subf %9, %10 : vector<16x1xf32>
    %12 = vector.broadcast %4 : vector<16x1xf32> to vector<16x128xf32>
    %13 = arith.subf %0, %12 : vector<16x128xf32>
    %cst_4 = arith.constant 9.99999997E-7 : f32
    %14 = vector.broadcast %cst_4 : f32 to vector<16x1xf32>
    %15 = arith.addf %11, %14 : vector<16x1xf32>
    %16 = math.rsqrt %15 : vector<16x1xf32>
    %17 = vector.broadcast %16 : vector<16x1xf32> to vector<16x128xf32>
    %18 = arith.mulf %13, %17 : vector<16x128xf32>
    %c0_5 = arith.constant 0 : index
    %c0_6 = arith.constant 0 : index
    %19 = vector.load %arg3[%c0_5, %c0_6] : memref<1x128xf32, #tpu.memory_space<vmem>>, vector<1x128xf32>
    %20 = vector.broadcast %19 : vector<1x128xf32> to vector<16x128xf32>
    %21 = arith.mulf %18, %20 : vector<16x128xf32>
    %c0_7 = arith.constant 0 : index
    %c0_8 = arith.constant 0 : index
    %22 = vector.load %arg4[%c0_7, %c0_8] : memref<1x128xf32, #tpu.memory_space<vmem>>, vector<1x128xf32>
    %23 = vector.broadcast %22 : vector<1x128xf32> to vector<16x128xf32>
    %24 = arith.addf %21, %23 : vector<16x128xf32>
    %25 = arith.truncf %24 : vector<16x128xf32> to vector<16x128xbf16>
    %c0_9 = arith.constant 0 : index
    %c0_10 = arith.constant 0 : index
    %26 = vector.load %arg5[%c0_9, %c0_10] : memref<128x256xbf16, #tpu.memory_space<vmem>>, vector<128x256xbf16>
    %cst_11 = arith.constant dense<0.000000e+00> : vector<16x256xf32>
    %27 = tpu.matmul %25, %26, %cst_11 {dimension_numbers = #tpu.dot_dimension_numbers<[1], [0], [0], [1], [0, 0, 1, 1], [], []>} : vector<16x128xbf16>, vector<128x256xbf16>, vector<16x256xf32> -> vector<16x256xf32>
    %c0_12 = arith.constant 0 : index
    %c0_13 = arith.constant 0 : index
    %28 = vector.load %arg6[%c0_12, %c0_13] : memref<1x256xf32, #tpu.memory_space<vmem>>, vector<1x256xf32>
    %29 = vector.broadcast %28 : vector<1x256xf32> to vector<16x256xf32>
    %30 = arith.addf %27, %29 : vector<16x256xf32>
    %31 = arith.mulf %30, %30 : vector<16x256xf32>
    %32 = arith.mulf %30, %31 : vector<16x256xf32>
    %cst_14 = arith.constant 4.471500e-02 : f32
    %33 = vector.broadcast %cst_14 : f32 to vector<16x256xf32>
    %34 = arith.mulf %33, %32 : vector<16x256xf32>
    %35 = arith.addf %30, %34 : vector<16x256xf32>
    %cst_15 = arith.constant 0.797884583 : f32
    %36 = vector.broadcast %cst_15 : f32 to vector<16x256xf32>
    %37 = arith.mulf %36, %35 : vector<16x256xf32>
    %38 = math.tanh %37 : vector<16x256xf32>
    %cst_16 = arith.constant 1.000000e+00 : f32
    %39 = vector.broadcast %cst_16 : f32 to vector<16x256xf32>
    %40 = arith.addf %39, %38 : vector<16x256xf32>
    %cst_17 = arith.constant 5.000000e-01 : f32
    %41 = vector.broadcast %cst_17 : f32 to vector<16x256xf32>
    %42 = arith.mulf %41, %40 : vector<16x256xf32>
    %43 = arith.mulf %30, %42 : vector<16x256xf32>
    %44 = arith.truncf %43 : vector<16x256xf32> to vector<16x256xbf16>
    %c0_18 = arith.constant 0 : index
    %c0_19 = arith.constant 0 : index
    %45 = vector.load %arg7[%c0_18, %c0_19] : memref<16x256xbf16, #tpu.memory_space<vmem>>, vector<16x256xbf16>
    tpu.vector_store %arg7[%c0_18, %c0_19], %44 {strides = array<i32>} : memref<16x256xbf16, #tpu.memory_space<vmem>>, vector<16x256xbf16>,
    return
  }
  func.func @transform_0(%arg0: i32, %arg1: i32) -> (i32, i32) {
    %c0_i32 = arith.constant 0 : i32
    %c0_i32_0 = arith.constant 0 : i32
    return %arg0, %c0_i32 : i32, i32
  }
  func.func @transform_1(%arg0: i32, %arg1: i32) -> (i32, i32) {
    %c0_i32 = arith.constant 0 : i32
    %c0_i32_0 = arith.constant 0 : i32
    %c0_i32_1 = arith.constant 0 : i32
    return %c0_i32, %c0_i32_0 : i32, i32
  }
  func.func @transform_2(%arg0: i32, %arg1: i32) -> (i32, i32) {
    %c0_i32 = arith.constant 0 : i32
    %c0_i32_0 = arith.constant 0 : i32
    %c0_i32_1 = arith.constant 0 : i32
    return %c0_i32, %c0_i32_0 : i32, i32
  }
  func.func @transform_3(%arg0: i32, %arg1: i32) -> (i32, i32) {
    %c0_i32 = arith.constant 0 : i32
    %c0_i32_0 = arith.constant 0 : i32
    return %c0_i32, %arg1 : i32, i32
  }
  func.func @transform_4(%arg0: i32, %arg1: i32) -> (i32, i32) {
    %c0_i32 = arith.constant 0 : i32
    %c0_i32_0 = arith.constant 0 : i32
    return %c0_i32, %arg1 : i32, i32
  }
  func.func @transform_5(%arg0: i32, %arg1: i32) -> (i32, i32) {
    %c0_i32 = arith.constant 0 : i32
    return %arg0, %arg1 : i32, i32
  }
}

module attributes {stable_mosaic.version = 11 : i64} {
  func.func @kernel(%arg0: i32, %arg1: i32, %arg2: memref<16x256xbf16, #tpu.memory_space<vmem>>, %arg3: memref<256x128xbf16, #tpu.memory_space<vmem>>, %arg4: memref<1x128xf32, #tpu.memory_space<vmem>>, %arg5: memref<16x128xf32, #tpu.memory_space<vmem>>, %arg6: memref<16x128xf32, #tpu.memory_space<vmem>>) attributes {dimension_semantics = [#tpu.dimension_semantics<parallel>, #tpu.dimension_semantics<parallel>], iteration_bounds = array<i64: 1, 1>, scalar_prefetch = 0 : i64, scratch_operands = 0 : i64, tpu.core_type = #tpu.core_type<tc>, window_params = [{transform_indices = @transform_0, window_bounds = array<i64: 16, 256>}, {transform_indices = @transform_1, window_bounds = array<i64: 256, 128>}, {transform_indices = @transform_2, window_bounds = array<i64: 1, 128>}, {transform_indices = @transform_3, window_bounds = array<i64: 16, 128>}, {transform_indices = @transform_4, window_bounds = array<i64: 16, 128>}]} {
    %c0 = arith.constant 0 : index
    %c0_0 = arith.constant 0 : index
    %0 = vector.load %arg2[%c0, %c0_0] : memref<16x256xbf16, #tpu.memory_space<vmem>>, vector<16x256xbf16>
    %c0_1 = arith.constant 0 : index
    %c0_2 = arith.constant 0 : index
    %1 = vector.load %arg3[%c0_1, %c0_2] : memref<256x128xbf16, #tpu.memory_space<vmem>>, vector<256x128xbf16>
    %cst = arith.constant dense<0.000000e+00> : vector<16x128xf32>
    %2 = tpu.matmul %0, %1, %cst {dimension_numbers = #tpu.dot_dimension_numbers<[1], [0], [0], [1], [0, 0, 1, 1], [], []>} : vector<16x256xbf16>, vector<256x128xbf16>, vector<16x128xf32> -> vector<16x128xf32>
    %c0_3 = arith.constant 0 : index
    %c0_4 = arith.constant 0 : index
    %3 = vector.load %arg4[%c0_3, %c0_4] : memref<1x128xf32, #tpu.memory_space<vmem>>, vector<1x128xf32>
    %4 = vector.broadcast %3 : vector<1x128xf32> to vector<16x128xf32>
    %5 = arith.addf %2, %4 : vector<16x128xf32>
    %c0_5 = arith.constant 0 : index
    %c0_6 = arith.constant 0 : index
    %6 = vector.load %arg5[%c0_5, %c0_6] : memref<16x128xf32, #tpu.memory_space<vmem>>, vector<16x128xf32>
    %7 = arith.addf %5, %6 : vector<16x128xf32>
    %c0_7 = arith.constant 0 : index
    %c0_8 = arith.constant 0 : index
    %8 = vector.load %arg6[%c0_7, %c0_8] : memref<16x128xf32, #tpu.memory_space<vmem>>, vector<16x128xf32>
    tpu.vector_store %arg6[%c0_7, %c0_8], %7 {strides = array<i32>} : memref<16x128xf32, #tpu.memory_space<vmem>>, vector<16x128xf32>,
    return
  }
  func.func @transform_0(%arg0: i32, %arg1: i32) -> (i32, i32) {
    %c0_i32 = arith.constant 0 : i32
    %c0_i32_0 = arith.constant 0 : i32
    return %arg0, %c0_i32 : i32, i32
  }
  func.func @transform_1(%arg0: i32, %arg1: i32) -> (i32, i32) {
    %c0_i32 = arith.constant 0 : i32
    %c0_i32_0 = arith.constant 0 : i32
    return %c0_i32, %arg1 : i32, i32
  }
  func.func @transform_2(%arg0: i32, %arg1: i32) -> (i32, i32) {
    %c0_i32 = arith.constant 0 : i32
    %c0_i32_0 = arith.constant 0 : i32
    return %c0_i32, %arg1 : i32, i32
  }
  func.func @transform_3(%arg0: i32, %arg1: i32) -> (i32, i32) {
    %c0_i32 = arith.constant 0 : i32
    return %arg0, %arg1 : i32, i32
  }
  func.func @transform_4(%arg0: i32, %arg1: i32) -> (i32, i32) {
    %c0_i32 = arith.constant 0 : i32
    return %arg0, %arg1 : i32, i32
  }
}

module attributes {stable_mosaic.version = 11 : i64} {
  func.func @kernel(%arg0: i32, %arg1: i32, %arg2: memref<8x128xf32, #tpu.memory_space<vmem>>, %arg3: memref<1x128xf32, #tpu.memory_space<vmem>>, %arg4: memref<1x128xf32, #tpu.memory_space<vmem>>, %arg5: memref<128x128xbf16, #tpu.memory_space<vmem>>, %arg6: memref<1x128xf32, #tpu.memory_space<vmem>>, %arg7: memref<8x128xf32, #tpu.memory_space<vmem>>) attributes {dimension_semantics = [#tpu.dimension_semantics<parallel>, #tpu.dimension_semantics<parallel>], iteration_bounds = array<i64: 1, 1>, scalar_prefetch = 0 : i64, scratch_operands = 0 : i64, tpu.core_type = #tpu.core_type<tc>, window_params = [{transform_indices = @transform_0, window_bounds = array<i64: 8, 128>}, {pipeline_mode = #tpu.pipeline_mode<synchronous>, transform_indices = @transform_1, window_bounds = array<i64: 1, 128>}, {pipeline_mode = #tpu.pipeline_mode<synchronous>, transform_indices = @transform_2, window_bounds = array<i64: 1, 128>}, {transform_indices = @transform_3, window_bounds = array<i64: 128, 128>}, {transform_indices = @transform_4, window_bounds = array<i64: 1, 128>}, {transform_indices = @transform_5, window_bounds = array<i64: 8, 128>}]} {
    %c0 = arith.constant 0 : index
    %c0_0 = arith.constant 0 : index
    %0 = vector.load %arg2[%c0, %c0_0] : memref<8x128xf32, #tpu.memory_space<vmem>>, vector<8x128xf32>
    %cst = arith.constant dense<0.000000e+00> : vector<8xf32>
    %1 = vector.multi_reduction <add>, %0, %cst [1] : vector<8x128xf32> to vector<8xf32>
    %2 = vector.shape_cast %1 : vector<8xf32> to vector<8x1xf32>
    %cst_1 = arith.constant 7.812500e-03 : f32
    %3 = vector.broadcast %cst_1 : f32 to vector<8x1xf32>
    %4 = arith.mulf %2, %3 : vector<8x1xf32>
    %5 = arith.mulf %0, %0 : vector<8x128xf32>
    %cst_2 = arith.constant dense<0.000000e+00> : vector<8xf32>
    %6 = vector.multi_reduction <add>, %5, %cst_2 [1] : vector<8x128xf32> to vector<8xf32>
    %7 = vector.shape_cast %6 : vector<8xf32> to vector<8x1xf32>
    %cst_3 = arith.constant 7.812500e-03 : f32
    %8 = vector.broadcast %cst_3 : f32 to vector<8x1xf32>
    %9 = arith.mulf %7, %8 : vector<8x1xf32>
    %10 = arith.mulf %4, %4 : vector<8x1xf32>
    %11 = arith.subf %9, %10 : vector<8x1xf32>
    %12 = vector.broadcast %4 : vector<8x1xf32> to vector<8x128xf32>
    %13 = arith.subf %0, %12 : vector<8x128xf32>
    %cst_4 = arith.constant 9.99999997E-7 : f32
    %14 = vector.broadcast %cst_4 : f32 to vector<8x1xf32>
    %15 = arith.addf %11, %14 : vector<8x1xf32>
    %16 = math.rsqrt %15 : vector<8x1xf32>
    %17 = vector.broadcast %16 : vector<8x1xf32> to vector<8x128xf32>
    %18 = arith.mulf %13, %17 : vector<8x128xf32>
    %c0_5 = arith.constant 0 : index
    %c0_6 = arith.constant 0 : index
    %19 = vector.load %arg3[%c0_5, %c0_6] : memref<1x128xf32, #tpu.memory_space<vmem>>, vector<1x128xf32>
    %20 = vector.broadcast %19 : vector<1x128xf32> to vector<8x128xf32>
    %21 = arith.mulf %18, %20 : vector<8x128xf32>
    %c0_7 = arith.constant 0 : index
    %c0_8 = arith.constant 0 : index
    %22 = vector.load %arg4[%c0_7, %c0_8] : memref<1x128xf32, #tpu.memory_space<vmem>>, vector<1x128xf32>
    %23 = vector.broadcast %22 : vector<1x128xf32> to vector<8x128xf32>
    %24 = arith.addf %21, %23 : vector<8x128xf32>
    %25 = arith.truncf %24 : vector<8x128xf32> to vector<8x128xbf16>
    %c0_9 = arith.constant 0 : index
    %c0_10 = arith.constant 0 : index
    %26 = vector.load %arg5[%c0_9, %c0_10] : memref<128x128xbf16, #tpu.memory_space<vmem>>, vector<128x128xbf16>
    %cst_11 = arith.constant dense<0.000000e+00> : vector<8x128xf32>
    %27 = tpu.matmul %25, %26, %cst_11 {dimension_numbers = #tpu.dot_dimension_numbers<[1], [0], [0], [1], [0, 0, 1, 1], [], []>} : vector<8x128xbf16>, vector<128x128xbf16>, vector<8x128xf32> -> vector<8x128xf32>
    %c0_12 = arith.constant 0 : index
    %c0_13 = arith.constant 0 : index
    %28 = vector.load %arg6[%c0_12, %c0_13] : memref<1x128xf32, #tpu.memory_space<vmem>>, vector<1x128xf32>
    %29 = vector.broadcast %28 : vector<1x128xf32> to vector<8x128xf32>
    %30 = arith.addf %27, %29 : vector<8x128xf32>
    %c0_14 = arith.constant 0 : index
    %c0_15 = arith.constant 0 : index
    %31 = vector.load %arg7[%c0_14, %c0_15] : memref<8x128xf32, #tpu.memory_space<vmem>>, vector<8x128xf32>
    tpu.vector_store %arg7[%c0_14, %c0_15], %30 {strides = array<i32>} : memref<8x128xf32, #tpu.memory_space<vmem>>, vector<8x128xf32>,
    return
  }
  func.func @transform_0(%arg0: i32, %arg1: i32) -> (i32, i32) {
    %c0_i32 = arith.constant 0 : i32
    %c0_i32_0 = arith.constant 0 : i32
    return %arg0, %c0_i32 : i32, i32
  }
  func.func @transform_1(%arg0: i32, %arg1: i32) -> (i32, i32) {
    %c0_i32 = arith.constant 0 : i32
    %c0_i32_0 = arith.constant 0 : i32
    %c0_i32_1 = arith.constant 0 : i32
    return %c0_i32, %c0_i32_0 : i32, i32
  }
  func.func @transform_2(%arg0: i32, %arg1: i32) -> (i32, i32) {
    %c0_i32 = arith.constant 0 : i32
    %c0_i32_0 = arith.constant 0 : i32
    %c0_i32_1 = arith.constant 0 : i32
    return %c0_i32, %c0_i32_0 : i32, i32
  }
  func.func @transform_3(%arg0: i32, %arg1: i32) -> (i32, i32) {
    %c0_i32 = arith.constant 0 : i32
    %c0_i32_0 = arith.constant 0 : i32
    return %c0_i32, %arg1 : i32, i32
  }
  func.func @transform_4(%arg0: i32, %arg1: i32) -> (i32, i32) {
    %c0_i32 = arith.constant 0 : i32
    %c0_i32_0 = arith.constant 0 : i32
    return %c0_i32, %arg1 : i32, i32
  }
  func.func @transform_5(%arg0: i32, %arg1: i32) -> (i32, i32) {
    %c0_i32 = arith.constant 0 : i32
    return %arg0, %arg1 : i32, i32
  }
}

</mosaic_0001>

<llo_original>
// kernel: lora_vit_forward.15
$region0: #{lora_vit_forward.15}
  #allocation0 [shape = 'u32[]', space=smem, size = 0x4, offset = 0x4, fixed_abs, tag = 'smem constant byte address 0x4 - core index']
  #allocation1 [shape = 'u32[144,128]{1,0:T(1,128)}', space=vmem, size = 0x12000, scoped, tag = 'internal scratch']
  %s0 = inlined_call_operand.vmem [shape: bf16[16,128], index: 0, kind: input, shape index: {}]
  %s1 = inlined_call_operand.vmem [shape: bf16[128,128], index: 1, kind: input, shape index: {}]
  %s2 = inlined_call_operand.vmem [shape: f32[1,128], index: 2, kind: input, shape index: {}]
  %s3 = inlined_call_operand.vmem [shape: f32[16,128], index: 3, kind: input, shape index: {}]
  %s4 = inlined_call_operand.vmem [shape: f32[16,128], index: 4, kind: output, shape index: {}]
  %s5 = sld [smem:[#allocation0]]
  $region26: #{lora_vit_forward.15} parent=0
    _
  %s7 = ssub.s32 1, %s5
  %s8 = scalar_select 0, %s7, %s5
  // Predicated region
  $region2: #{lora_vit_forward.15} parent=0 // pred_check
    _
  $region3: #{lora_vit_forward.15} parent=0 // pred_check_branch
    %10 = sbr.rel (0) target = $region5
  $region4: #{lora_vit_forward.15} parent=0 // pred_region
    _
  $region5: #{lora_vit_forward.15} parent=0 // pred_fallthru
    _
  // Predicated region
  $region6: #{lora_vit_forward.15} parent=0 // pred_check
    _
  $region7: #{lora_vit_forward.15} parent=0 // pred_check_branch
    %12 = sbr.rel (0) target = $region9
  $region8: #{lora_vit_forward.15} parent=0 // pred_region
    _
  $region9: #{lora_vit_forward.15} parent=0 // pred_fallthru
    _
  // Predicated region
  $region10: #{lora_vit_forward.15} parent=0 // pred_check
    _
  $region11: #{lora_vit_forward.15} parent=0 // pred_check_branch
    %14 = sbr.rel (0) target = $region13
  $region12: #{lora_vit_forward.15} parent=0 // pred_region
    _
  $region13: #{lora_vit_forward.15} parent=0 // pred_fallthru
    _
  // Predicated region
  $region14: #{lora_vit_forward.15} parent=0 // pred_check
    _
  $region15: #{lora_vit_forward.15} parent=0 // pred_check_branch
    %16 = sbr.rel (0) target = $region17
  $region16: #{lora_vit_forward.15} parent=0 // pred_region
    _
  $region17: #{lora_vit_forward.15} parent=0 // pred_fallthru
    _
  %v18 = vld [vmem:[%s0] sm:$0xf]
  %v19 = vld [vmem:[%s0 + $0x4] sm:$0xf]
  %v20 = vld [vmem:[%s1] sm:$0xf]
  %v21 = vld [vmem:[%s1 + $0x4] sm:$0xf]
  %v22 = vld [vmem:[%s1 + $0x8] sm:$0xf]
  %v23 = vld [vmem:[%s1 + $0xc] sm:$0xf]
  %v24 = vld [vmem:[%s1 + $0x10] sm:$0xf]
  %v25 = vld [vmem:[%s1 + $0x14] sm:$0xf]
  %v26 = vld [vmem:[%s1 + $0x18] sm:$0xf]
  %v27 = vld [vmem:[%s1 + $0x1c] sm:$0xf]
  %v28 = vld [vmem:[%s1 + $0x20] sm:$0xf]
  %v29 = vld [vmem:[%s1 + $0x24] sm:$0xf]
  %v30 = vld [vmem:[%s1 + $0x28] sm:$0xf]
  %v31 = vld [vmem:[%s1 + $0x2c] sm:$0xf]
  %v32 = vld [vmem:[%s1 + $0x30] sm:$0xf]
  %v33 = vld [vmem:[%s1 + $0x34] sm:$0xf]
  %v34 = vld [vmem:[%s1 + $0x38] sm:$0xf]
  %v35 = vld [vmem:[%s1 + $0x3c] sm:$0xf]
  %v36 = vld [vmem:[%s2] sm:$0x1]
  %v38 = vlaneseq
  %v39 = vshrl.u32 %v38, 7
  %v40 = vsub.s32 0, %v39
  %v41 = vrot.slane %v36, %v40
  %v45 = vunpack.c.l.b16 %v18
  %v46 = vunpack.c.l.b16 %v19
  %v47 = vpack.c.b16 %v46, %v45
  %v65 = vunpack.c.l.b16 %v20
  %v66 = vunpack.c.l.b16 %v21
  %v67 = vunpack.c.l.b16 %v22
  %v68 = vunpack.c.l.b16 %v23
  %v69 = vunpack.c.l.b16 %v24
  %v70 = vunpack.c.l.b16 %v25
  %v71 = vunpack.c.l.b16 %v26
  %v72 = vunpack.c.l.b16 %v27
  %v73 = vunpack.c.l.b16 %v28
  %v74 = vunpack.c.l.b16 %v29
  %v75 = vunpack.c.l.b16 %v30
  %v76 = vunpack.c.l.b16 %v31
  %v77 = vunpack.c.l.b16 %v32
  %v78 = vunpack.c.l.b16 %v33
  %v79 = vunpack.c.l.b16 %v34
  %v80 = vunpack.c.l.b16 %v35
  %v81 = vpack.c.b16 %v66, %v65
  %v82 = vpack.c.b16 %v68, %v67
  %v83 = vpack.c.b16 %v70, %v69
  %v84 = vpack.c.b16 %v72, %v71
  %v85 = vpack.c.b16 %v74, %v73
  %v86 = vpack.c.b16 %v76, %v75
  %v87 = vpack.c.b16 %v78, %v77
  %v88 = vpack.c.b16 %v80, %v79
  %97 = vmatprep.subr.bf16.mxu0 0
  %98 = vmatpush1.bf16.msra.mxu0 %v81
  %99 = vmatprep.subr.bf16.mxu0 0
  %100 = vmatpush1.bf16.msra.mxu0 %v82
  %101 = vmatprep.subr.bf16.mxu0 0
  %102 = vmatpush1.bf16.msra.mxu0 %v83
  %103 = vmatprep.subr.bf16.mxu0 0
  %104 = vmatpush1.bf16.msra.mxu0 %v84
  %105 = vmatprep.subr.bf16.mxu0 0
  %106 = vmatpush1.bf16.msra.mxu0 %v85
  %107 = vmatprep.subr.bf16.mxu0 0
  %108 = vmatpush1.bf16.msra.mxu0 %v86
  %109 = vmatprep.subr.bf16.mxu0 0
  %110 = vmatpush1.bf16.msra.mxu0 %v87
  %111 = vmatprep.subr.bf16.mxu0 0
  %112 = vmatpush1.bf16.msra.mxu0 %v88
  %113 = vmatprep.subr.bf16.mxu0 0
  %114 = vmatpush1.bf16.msra.mxu0 0
  %115 = vmatprep.subr.bf16.mxu0 0
  %116 = vmatpush1.bf16.msra.mxu0 0
  %117 = vmatprep.subr.bf16.mxu0 0
  %118 = vmatpush1.bf16.msra.mxu0 0
  %119 = vmatprep.subr.bf16.mxu0 0
  %120 = vmatpush1.bf16.msra.mxu0 0
  %121 = vmatprep.subr.bf16.mxu0 0
  %122 = vmatpush1.bf16.msra.mxu0 0
  %123 = vmatprep.subr.bf16.mxu0 0
  %124 = vmatpush1.bf16.msra.mxu0 0
  %125 = vmatprep.subr.bf16.mxu0 0
  %126 = vmatpush1.bf16.msra.mxu0 0
  %127 = vmatprep.subr.bf16.mxu0 0
  %128 = vmatpush1.bf16.msra.mxu0 0
  %129 = vmatprep.mubr.bf16.mxu0 0
  %130 = vmatmul.mubr.bf16.gmra.mrb[0].mxu0 %v47
  %v131 = vpop.f32.mrb[0].mxu0
  %v132 = vadd.f32 %v41, %v131
  %v133 = vpop.f32.mrb[0].mxu0
  %v134 = vpop.f32.mrb[0].mxu0
  %v135 = vadd.f32 %v41, %v134
  %v136 = vpop.f32.mrb[0].mxu0
  %137 = vdwg.mxu0
  %v138 = vld [vmem:[%s3] sm:$0xff]
  %v139 = vld [vmem:[%s3 + $0x8] sm:$0xff]
  %v140 = vadd.f32 %v132, %v138
  %v141 = vadd.f32 %v135, %v139
  %142 = vst [vmem:[%s4] sm:$0xff] %v140
  %143 = vst [vmem:[%s4 + $0x8] sm:$0xff] %v141
  // Predicated region
  $region18: #{lora_vit_forward.15} parent=0 // pred_check
    _
  $region19: #{lora_vit_forward.15} parent=0 // pred_check_branch
    %145 = sbr.rel (0) target = $region21
  $region20: #{lora_vit_forward.15} parent=0 // pred_region
    _
  $region21: #{lora_vit_forward.15} parent=0 // pred_fallthru
    _
  // Predicated region
  $region22: #{lora_vit_forward.15} parent=0 // pred_check
    _
  $region23: #{lora_vit_forward.15} parent=0 // pred_check_branch
    %147 = sbr.rel (0) target = $region25
  $region24: #{lora_vit_forward.15} parent=0 // pred_region
    _
  $region25: #{lora_vit_forward.15} parent=0 // pred_fallthru
    _

// kernel: lora_vit_forward.14
$region0: #{lora_vit_forward.14}
  #allocation0 [shape = 'u32[]', space=smem, size = 0x4, offset = 0x4, fixed_abs, tag = 'smem constant byte address 0x4 - core index']
  #allocation1 [shape = 'u32[144,128]{1,0:T(1,128)}', space=vmem, size = 0x12000, scoped, tag = 'internal scratch']
  %s0 = inlined_call_operand.vmem [shape: bf16[2,8,384], index: 0, kind: input, shape index: {}, may-alias: {0,1}]
  %s1 = inlined_call_operand.vmem [shape: bf16[2,8,384], index: 1, kind: input, shape index: {}, may-alias: {0,1}]
  %s2 = inlined_call_operand.vmem [shape: bf16[2,8,128], index: 2, kind: output, shape index: {}]
  %s3 = sld [smem:[#allocation0]]
  $region41: #{lora_vit_forward.14} parent=0
    _
  %s5 = ssub.s32 1, %s3
  %s6 = scalar_select 0, %s5, %s3
  loop: start=0, step=1, limit=4
  $region2: #{lora_vit_forward.14} parent=0 // loop_pre_header
    _
  $region3: #{lora_vit_forward.14} parent=0 // loop_header
    %s8 = sphi 0, %s12
    %p9 = scmp.ge.s32.totalorder %s8, 4
    %s15 = sphi 0, %s27
    %s16 = sphi 0, %s23
    %s17 = sphi 0, %s15
    %s18 = sphi 0, %s16
    %s19 = sphi 0, %s17
    %s20 = sphi 0, %s18
    %s32 = sphi 0, %s34
    %s35 = sphi 0, %s32
    %s36 = sphi 0, %s35
    %s52 = sphi 0, %s36
    %s58 = sphi 0, %s60
    %s61 = sphi 0, %s58
    %s62 = sphi 0, %s61
    %s78 = sphi 0, %s62
    %s86 = sphi 0, %s88
    %s89 = sphi 0, %s86
    %s90 = sphi 0, %s89
    %s106 = sphi 0, %s90
  $region4: #{lora_vit_forward.14} parent=0 // loop_header_branch
    %11 = sbr.rel (%p9) target = $region8
  $region5: #{lora_vit_forward.14} parent=0 // loop_body
    %s13 = ssub.s32 %s8, 1
    %s14 = ssub.s32 %s8, 2
    %s21 = sadd.s32 1, %s16
    %p22 = scmp.ge.s32.totalorder %s21, 1
    %s23 = scalar_select %p22, 0, %s21
    %s24 = sadd.s32 1, %s15
    %s25 = scalar_select %p22, %s24, %s15
    %p26 = scmp.ge.s32.totalorder %s25, 2
    %s27 = scalar_select %p26, 0, %s25
    %s28 = ssub.s32 %s15, %s27
    %s29 = ssub.s32 %s16, %s23
    %s30 = sor.u32 %s28, %s29
    %p31 = scmp.eq.s32.totalorder %s30, 0
    %s33 = sadd.s32 %s32, 1
    %s34 = scalar_select %p31, %s32, %s33
    %p37 = pneg %p31
    %p38 = scmp.eq.s32.totalorder %s8, 1
    %p39 = por %p37, %p38
    %p40 = scmp.ne.s32.totalorder %s32, %s35
    %p41 = scmp.eq.s32.totalorder %s8, 0
    %p42 = por %p40, %p41
    %p43 = scmp.ne.s32.totalorder %s32, %s35
    %p44 = scmp.eq.s32.totalorder %s13, 1
    %p45 = por %p43, %p44
    %p46 = scmp.ne.s32.totalorder %s35, %s36
    %p47 = scmp.eq.s32.totalorder %s13, 0
    %p48 = por %p46, %p47
    %p49 = scmp.ne.s32.totalorder %s35, %s36
    %p50 = scmp.eq.s32.totalorder %s14, 1
    %p51 = por %p49, %p50
    %p53 = scmp.ne.s32.totalorder %s36, %s52
    %p54 = scmp.eq.s32.totalorder %s14, 0
    %p55 = por %p53, %p54
    %s56 = ssub.s32 %s15, %s27
    %p57 = scmp.eq.s32.totalorder %s56, 0
    %s59 = sadd.s32 %s58, 1
    %s60 = scalar_select %p57, %s58, %s59
    %p63 = pneg %p57
    %p64 = scmp.eq.s32.totalorder %s8, 1
    %p65 = por %p63, %p64
    %p66 = scmp.ne.s32.totalorder %s58, %s61
    %p67 = scmp.eq.s32.totalorder %s8, 0
    %p68 = por %p66, %p67
    %p69 = scmp.ne.s32.totalorder %s58, %s61
    %p70 = scmp.eq.s32.totalorder %s13, 1
    %p71 = por %p69, %p70
    %p72 = scmp.ne.s32.totalorder %s61, %s62
    %p73 = scmp.eq.s32.totalorder %s13, 0
    %p74 = por %p72, %p73
    %p75 = scmp.ne.s32.totalorder %s61, %s62
    %p76 = scmp.eq.s32.totalorder %s14, 1
    %p77 = por %p75, %p76
    %p79 = scmp.ne.s32.totalorder %s62, %s78
    %p80 = scmp.eq.s32.totalorder %s14, 0
    %p81 = por %p79, %p80
    %s82 = ssub.s32 %s15, %s27
    %s83 = ssub.s32 %s16, %s23
    %s84 = sor.u32 %s82, %s83
    %p85 = scmp.eq.s32.totalorder %s84, 0
    %s87 = sadd.s32 %s86, 1
    %s88 = scalar_select %p85, %s86, %s87
    %p91 = pneg %p85
    %p92 = scmp.eq.s32.totalorder %s8, 1
    %p93 = por %p91, %p92
    %p94 = scmp.ne.s32.totalorder %s86, %s89
    %p95 = scmp.eq.s32.totalorder %s8, 0
    %p96 = por %p94, %p95
    %p97 = scmp.ne.s32.totalorder %s86, %s89
    %p98 = scmp.eq.s32.totalorder %s13, 1
    %p99 = por %p97, %p98
    %p100 = scmp.ne.s32.totalorder %s89, %s90
    %p101 = scmp.eq.s32.totalorder %s13, 0
    %p102 = por %p100, %p101
    %p103 = scmp.ne.s32.totalorder %s89, %s90
    %p104 = scmp.eq.s32.totalorder %s14, 1
    %p105 = por %p103, %p104
    %p107 = scmp.ne.s32.totalorder %s90, %s106
    %p108 = scmp.eq.s32.totalorder %s14, 0
    %p109 = por %p107, %p108
    %p110 = scmp.le.s32.totalorder 1, %s8
    %p111 = scmp.lt.s32.totalorder %s8, 3
    %p112 = pnand %p110, %p111
    %p113 = pneg %p112
    // Predicated region
    $region9: #{lora_vit_forward.14} parent=5 // pred_check
      _
    $region10: #{lora_vit_forward.14} parent=5 // pred_check_branch
      %115 = sbr.rel (%p112) target = $region12
    $region11: #{lora_vit_forward.14} parent=5 // pred_region
      %s116 = ssub.s32 %s8, 1
    $region12: #{lora_vit_forward.14} parent=5 // pred_fallthru
      _
    %p117 = scmp.lt.s32.totalorder %s8, 2
    // Predicated region
    $region13: #{lora_vit_forward.14} parent=5 // pred_check
      %p118 = pneg %p117
    $region14: #{lora_vit_forward.14} parent=5 // pred_check_branch
      %120 = sbr.rel (%p118) target = $region16
    $region15: #{lora_vit_forward.14} parent=5 // pred_region
      // Predicated region
      $region17: #{lora_vit_forward.14} parent=15 // pred_check
        %p121 = pneg %p42
      $region18: #{lora_vit_forward.14} parent=15 // pred_check_branch
        %123 = sbr.rel (%p121) target = $region20
      $region19: #{lora_vit_forward.14} parent=15 // pred_region
        %p124 = scmp.lt.s32.totalorder %s15, 1
        %s125 = scalar_select %p124, %s15, 1
        %p126 = scmp.lt.s32.totalorder %s16, 0
        %s127 = scalar_select %p126, %s16, 0
        %s128 = smul.addr %s127, 3
        %s129 = smul.addr %s125, 3
        %s130 = sadd.s32 %s128, %s129
        %s131 = smul.addr %s130, 4
        %s132 = scalar_lea.vmem %s0, %s131
      $region20: #{lora_vit_forward.14} parent=15 // pred_fallthru
        _
      // Predicated region
      $region21: #{lora_vit_forward.14} parent=15 // pred_check
        %p133 = pneg %p68
      $region22: #{lora_vit_forward.14} parent=15 // pred_check_branch
        %135 = sbr.rel (%p133) target = $region24
      $region23: #{lora_vit_forward.14} parent=15 // pred_region
        %p136 = scmp.lt.s32.totalorder %s15, 1
        %s137 = scalar_select %p136, %s15, 1
        %s138 = smul.addr %s137, 3
        %s139 = smul.addr %s138, 4
        %s140 = scalar_lea.vmem %s1, %s139
      $region24: #{lora_vit_forward.14} parent=15 // pred_fallthru
        _
    $region16: #{lora_vit_forward.14} parent=5 // pred_fallthru
      _
    %p141 = scmp.le.s32.totalorder 1, %s8
    %p142 = scmp.lt.s32.totalorder %s8, 3
    %p143 = pnand %p141, %p142
    %p144 = pneg %p143
    // Predicated region
    $region25: #{lora_vit_forward.14} parent=5 // pred_check
      _
    $region26: #{lora_vit_forward.14} parent=5 // pred_check_branch
      %146 = sbr.rel (%p143) target = $region28
    $region27: #{lora_vit_forward.14} parent=5 // pred_region
      %s147 = ssub.s32 %s8, 1
      %p148 = scmp.lt.s32.totalorder %s17, 1
      %s149 = scalar_select %p148, %s17, 1
      %p150 = scmp.lt.s32.totalorder %s18, 0
      %s151 = scalar_select %p150, %s18, 0
      %s152 = smul.addr %s151, 3
      %s153 = smul.addr %s149, 3
      %s154 = sadd.s32 %s152, %s153
      %s155 = smul.addr %s154, 4
      %s156 = scalar_lea.vmem %s0, %s155
      %p157 = pneg %p48
      %p158 = pneg %p45
      %p159 = scmp.lt.s32.totalorder %s17, 1
      %s160 = scalar_select %p159, %s17, 1
      %s161 = smul.addr %s160, 3
      %s162 = smul.addr %s161, 4
      %s163 = scalar_lea.vmem %s1, %s162
      %p164 = pneg %p74
      %p165 = pneg %p71
      %p166 = pneg %p102
      %p167 = pneg %p99
      %p168 = scmp.lt.s32.totalorder %s17, 1
      %s169 = scalar_select %p168, %s17, 1
      %p170 = scmp.lt.s32.totalorder %s18, 0
      %s171 = scalar_select %p170, %s18, 0
      %s172 = sadd.s32 %s171, %s169
      %s173 = smul.addr %s172, 4
      %s174 = scalar_lea.vmem %s2, %s173
      %p175 = scmp.lt.s32.totalorder %s17, 1
      %s176 = scalar_select %p175, %s17, 1
      %p177 = scmp.lt.s32.totalorder %s18, 0
      %s178 = scalar_select %p177, %s18, 0
      %s179 = smul.addr %s178, 3
      %s180 = smul.addr %s176, 3
      %s181 = sadd.s32 %s179, %s180
      %s182 = smul.addr %s181, 4
      %s183 = scalar_lea.vmem %s0, %s182
      %p184 = scmp.lt.s32.totalorder %s17, 1
      %s185 = scalar_select %p184, %s17, 1
      %s186 = smul.addr %s185, 3
      %s187 = smul.addr %s186, 4
      %s188 = scalar_lea.vmem %s1, %s187
      %p189 = scmp.lt.s32.totalorder %s17, 1
      %s190 = scalar_select %p189, %s17, 1
      %p191 = scmp.lt.s32.totalorder %s18, 0
      %s192 = scalar_select %p191, %s18, 0
      %s193 = sadd.s32 %s192, %s190
      %s194 = smul.addr %s193, 4
      %s195 = scalar_lea.vmem %s2, %s194
      %v197 = vld [vmem:[%s183] sm:$0xf]
      %v198 = vld [vmem:[%s188] sm:$0xff]
      %v199 = vld [vmem:[%s188 + $0x8] sm:$0xf]
      %v200 = vlaneseq
      %v201 = vand.u32 %v200, 127
      %vm202 = vcmp.lt.s32.totalorder %v201, 5
      %v204 = vunpack.c.h.b16 %v198
      %v205 = vpack.c.b16 %v204, %v204
      %vm206 = vcmask 523264
      %v208 = vsel %vm206, %v197, 0
      %v211 = vsel %vm206, %v205, 0
      %213 = vmatprep.subr.bf16.mxu0 0
      %214 = vmatpush1.bf16.xpose.msra.mxu0 %v211
      %215 = vmatprep.subr.bf16.mxu0 0
      %216 = vmatpush1.bf16.xpose.msra.mxu0 0
      %217 = vmatprep.subr.bf16.mxu0 0
      %218 = vmatpush1.bf16.xpose.msra.mxu0 0
      %219 = vmatprep.subr.bf16.mxu0 0
      %220 = vmatpush1.bf16.xpose.msra.mxu0 0
      %221 = vmatprep.subr.bf16.mxu0 0
      %222 = vmatpush1.bf16.xpose.msra.mxu0 0
      %223 = vmatprep.subr.bf16.mxu0 0
      %224 = vmatpush1.bf16.xpose.msra.mxu0 0
      %225 = vmatprep.subr.bf16.mxu0 0
      %226 = vmatpush1.bf16.xpose.msra.mxu0 0
      %227 = vmatprep.subr.bf16.mxu0 0
      %228 = vmatpush1.bf16.xpose.msra.mxu0 0
      %229 = vmatprep.subr.bf16.mxu0 0
      %230 = vmatpush1.bf16.xpose.msra.mxu0 0
      %231 = vmatprep.subr.bf16.mxu0 0
      %232 = vmatpush1.bf16.xpose.msra.mxu0 0
      %233 = vmatprep.subr.bf16.mxu0 0
      %234 = vmatpush1.bf16.xpose.msra.mxu0 0
      %235 = vmatprep.subr.bf16.mxu0 0
      %236 = vmatpush1.bf16.xpose.msra.mxu0 0
      %237 = vmatprep.subr.bf16.mxu0 0
      %238 = vmatpush1.bf16.xpose.msra.mxu0 0
      %239 = vmatprep.subr.bf16.mxu0 0
      %240 = vmatpush1.bf16.xpose.msra.mxu0 0
      %241 = vmatprep.subr.bf16.mxu0 0
      %242 = vmatpush1.bf16.xpose.msra.mxu0 0
      %243 = vmatprep.subr.bf16.mxu0 0
      %244 = vmatpush1.bf16.xpose.msra.mxu0 0
      %245 = vmatprep.mubr.bf16.mxu0 0
      %246 = vmatmul.mubr.bf16.gmra.mrb[0].mxu0 %v208
      %v247 = vpop.f32.mrb[0].mxu0
      %v248 = vadd.f32 0.0, %v247
      %v249 = vpop.f32.mrb[0].mxu0
      %v250 = vpop.f32.mrb[0].mxu0
      %v251 = vpop.f32.mrb[0].mxu0
      %252 = vdwg.mxu0
      %v253 = vsel %vm202, %v248, -1e+30
      %vm254 = vcmask 64512
      %v255 = vsel %vm254, %v253, -inf
      %256 = vmax.xlane.f32.xlu0 %v255
      %v257 = vpop.xlane.xlu0 %256
      %v258 = vsub.f32 %v253, %v257
      %v259 = vmul.f32 %v258, 1.442695
      %v260 = vpow.pop %v259
      %v261 = vsel %vm254, %v260, 0.0
      %262 = vadd.xlane.f32.xlu0 %v261
      %v263 = vpop.xlane.xlu0 %262
      %v264 = vrcp.pop %v263
      %v265 = vmul.f32 %v260, %v264
      %v266 = vpack.c.bf16 %v265, %v265
      %v268 = vsel %vm254, %v266, 0
      %vm270 = vcmask 1043456
      %v272 = vsel %vm270, %v199, 0
      %274 = vmatprep.subr.bf16.mxu0 0
      %275 = vmatpush1.bf16.msra.mxu0 %v272
      %276 = vmatprep.subr.bf16.mxu0 0
      %277 = vmatpush1.bf16.msra.mxu0 0
      %278 = vmatprep.subr.bf16.mxu0 0
      %279 = vmatpush1.bf16.msra.mxu0 0
      %280 = vmatprep.subr.bf16.mxu0 0
      %281 = vmatpush1.bf16.msra.mxu0 0
      %282 = vmatprep.subr.bf16.mxu0 0
      %283 = vmatpush1.bf16.msra.mxu0 0
      %284 = vmatprep.subr.bf16.mxu0 0
      %285 = vmatpush1.bf16.msra.mxu0 0
      %286 = vmatprep.subr.bf16.mxu0 0
      %287 = vmatpush1.bf16.msra.mxu0 0
      %288 = vmatprep.subr.bf16.mxu0 0
      %289 = vmatpush1.bf16.msra.mxu0 0
      %290 = vmatprep.subr.bf16.mxu0 0
      %291 = vmatpush1.bf16.msra.mxu0 0
      %292 = vmatprep.subr.bf16.mxu0 0
      %293 = vmatpush1.bf16.msra.mxu0 0
      %294 = vmatprep.subr.bf16.mxu0 0
      %295 = vmatpush1.bf16.msra.mxu0 0
      %296 = vmatprep.subr.bf16.mxu0 0
      %297 = vmatpush1.bf16.msra.mxu0 0
      %298 = vmatprep.subr.bf16.mxu0 0
      %299 = vmatpush1.bf16.msra.mxu0 0
      %300 = vmatprep.subr.bf16.mxu0 0
      %301 = vmatpush1.bf16.msra.mxu0 0
      %302 = vmatprep.subr.bf16.mxu0 0
      %303 = vmatpush1.bf16.msra.mxu0 0
      %304 = vmatprep.subr.bf16.mxu0 0
      %305 = vmatpush1.bf16.msra.mxu0 0
      %306 = vmatprep.mubr.bf16.mxu0 0
      %307 = vmatmul.mubr.bf16.gmra.mrb[0].mxu0 %v268
      %v308 = vpop.f32.mrb[0].mxu0
      %v309 = vadd.f32 0.0, %v308
      %v310 = vpop.f32.mrb[0].mxu0
      %v311 = vpop.f32.mrb[0].mxu0
      %v312 = vpop.f32.mrb[0].mxu0
      %313 = vdwg.mxu0
      %v315 = vunpack.c.l.b16 %v197
      %v316 = vpack.c.b16 %v315, %v315
      %317 = vrot.lane.b32.xlu0 %v316, 64
      %v318 = vpop.permute.xlu0 %317
      %319 = vrot.lane.b32.xlu0 %v205, 64
      %v320 = vpop.permute.xlu0 %319
      %v322 = vsel %vm206, %v318, 0
      %v325 = vsel %vm206, %v320, 0
      %327 = vmatprep.subr.bf16.mxu0 0
      %328 = vmatpush1.bf16.xpose.msra.mxu0 %v325
      %329 = vmatprep.subr.bf16.mxu0 0
      %330 = vmatpush1.bf16.xpose.msra.mxu0 0
      %331 = vmatprep.subr.bf16.mxu0 0
      %332 = vmatpush1.bf16.xpose.msra.mxu0 0
      %333 = vmatprep.subr.bf16.mxu0 0
      %334 = vmatpush1.bf16.xpose.msra.mxu0 0
      %335 = vmatprep.subr.bf16.mxu0 0
      %336 = vmatpush1.bf16.xpose.msra.mxu0 0
      %337 = vmatprep.subr.bf16.mxu0 0
      %338 = vmatpush1.bf16.xpose.msra.mxu0 0
      %339 = vmatprep.subr.bf16.mxu0 0
      %340 = vmatpush1.bf16.xpose.msra.mxu0 0
      %341 = vmatprep.subr.bf16.mxu0 0
      %342 = vmatpush1.bf16.xpose.msra.mxu0 0
      %343 = vmatprep.subr.bf16.mxu0 0
      %344 = vmatpush1.bf16.xpose.msra.mxu0 0
      %345 = vmatprep.subr.bf16.mxu0 0
      %346 = vmatpush1.bf16.xpose.msra.mxu0 0
      %347 = vmatprep.subr.bf16.mxu0 0
      %348 = vmatpush1.bf16.xpose.msra.mxu0 0
      %349 = vmatprep.subr.bf16.mxu0 0
      %350 = vmatpush1.bf16.xpose.msra.mxu0 0
      %351 = vmatprep.subr.bf16.mxu0 0
      %352 = vmatpush1.bf16.xpose.msra.mxu0 0
      %353 = vmatprep.subr.bf16.mxu0 0
      %354 = vmatpush1.bf16.xpose.msra.mxu0 0
      %355 = vmatprep.subr.bf16.mxu0 0
      %356 = vmatpush1.bf16.xpose.msra.mxu0 0
      %357 = vmatprep.subr.bf16.mxu0 0
      %358 = vmatpush1.bf16.xpose.msra.mxu0 0
      %359 = vmatprep.mubr.bf16.mxu0 0
      %360 = vmatmul.mubr.bf16.gmra.mrb[0].mxu0 %v322
      %v361 = vpop.f32.mrb[0].mxu0
      %v362 = vadd.f32 0.0, %v361
      %v363 = vpop.f32.mrb[0].mxu0
      %v364 = vpop.f32.mrb[0].mxu0
      %v365 = vpop.f32.mrb[0].mxu0
      %366 = vdwg.mxu0
      %v367 = vsel %vm202, %v362, -1e+30
      %v368 = vsel %vm254, %v367, -inf
      %369 = vmax.xlane.f32.xlu0 %v368
      %v370 = vpop.xlane.xlu0 %369
      %v371 = vsub.f32 %v367, %v370
      %v372 = vmul.f32 %v371, 1.442695
      %v373 = vpow.pop %v372
      %v374 = vsel %vm254, %v373, 0.0
      %375 = vadd.xlane.f32.xlu0 %v374
      %v376 = vpop.xlane.xlu0 %375
      %v377 = vrcp.pop %v376
      %v378 = vmul.f32 %v373, %v377
      %v379 = vpack.c.bf16 %v378, %v378
      %v381 = vunpack.c.l.b16 %v199
      %v382 = vpack.c.b16 %v381, %v381
      %383 = vrot.lane.b32.xlu0 %v382, 64
      %v384 = vpop.permute.xlu0 %383
      %v386 = vsel %vm254, %v379, 0
      %v389 = vsel %vm270, %v384, 0
      %391 = vmatprep.subr.bf16.mxu0 0
      %392 = vmatpush1.bf16.msra.mxu0 %v389
      %393 = vmatprep.subr.bf16.mxu0 0
      %394 = vmatpush1.bf16.msra.mxu0 0
      %395 = vmatprep.subr.bf16.mxu0 0
      %396 = vmatpush1.bf16.msra.mxu0 0
      %397 = vmatprep.subr.bf16.mxu0 0
      %398 = vmatpush1.bf16.msra.mxu0 0
      %399 = vmatprep.subr.bf16.mxu0 0
      %400 = vmatpush1.bf16.msra.mxu0 0
      %401 = vmatprep.subr.bf16.mxu0 0
      %402 = vmatpush1.bf16.msra.mxu0 0
      %403 = vmatprep.subr.bf16.mxu0 0
      %404 = vmatpush1.bf16.msra.mxu0 0
      %405 = vmatprep.subr.bf16.mxu0 0
      %406 = vmatpush1.bf16.msra.mxu0 0
      %407 = vmatprep.subr.bf16.mxu0 0
      %408 = vmatpush1.bf16.msra.mxu0 0
      %409 = vmatprep.subr.bf16.mxu0 0
      %410 = vmatpush1.bf16.msra.mxu0 0
      %411 = vmatprep.subr.bf16.mxu0 0
      %412 = vmatpush1.bf16.msra.mxu0 0
      %413 = vmatprep.subr.bf16.mxu0 0
      %414 = vmatpush1.bf16.msra.mxu0 0
      %415 = vmatprep.subr.bf16.mxu0 0
      %416 = vmatpush1.bf16.msra.mxu0 0
      %417 = vmatprep.subr.bf16.mxu0 0
      %418 = vmatpush1.bf16.msra.mxu0 0
      %419 = vmatprep.subr.bf16.mxu0 0
      %420 = vmatpush1.bf16.msra.mxu0 0
      %421 = vmatprep.subr.bf16.mxu0 0
      %422 = vmatpush1.bf16.msra.mxu0 0
      %423 = vmatprep.mubr.bf16.mxu0 0
      %424 = vmatmul.mubr.bf16.gmra.mrb[0].mxu0 %v386
      %v425 = vpop.f32.mrb[0].mxu0
      %v426 = vadd.f32 0.0, %v425
      %v427 = vpop.f32.mrb[0].mxu0
      %v428 = vpop.f32.mrb[0].mxu0
      %v429 = vpop.f32.mrb[0].mxu0
      %430 = vdwg.mxu0
      %432 = vrot.lane.b32.xlu0 %v426, 64
      %v433 = vpop.permute.xlu0 %432
      %v435 = vsel %vm206, %v309, %v433
      %v436 = vpack.c.bf16 %v435, %v435
      %437 = vst [vmem:[%s195] sm:$0xf] %v436
      %p438 = scmp.lt.s32.totalorder %s17, 1
      %s439 = scalar_select %p438, %s17, 1
      %p440 = scmp.lt.s32.totalorder %s18, 0
      %s441 = scalar_select %p440, %s18, 0
      %s442 = sadd.s32 %s441, %s439
      %s443 = smul.addr %s442, 4
      %s444 = scalar_lea.vmem %s2, %s443
      // Predicated region
      $region29: #{lora_vit_forward.14} parent=27 // pred_check
        %p445 = pneg %p99
      $region30: #{lora_vit_forward.14} parent=27 // pred_check_branch
        %447 = sbr.rel (%p445) target = $region32
      $region31: #{lora_vit_forward.14} parent=27 // pred_region
        _
      $region32: #{lora_vit_forward.14} parent=27 // pred_fallthru
        _
    $region28: #{lora_vit_forward.14} parent=5 // pred_fallthru
      _
    %p448 = scmp.le.s32.totalorder 2, %s8
    // Predicated region
    $region33: #{lora_vit_forward.14} parent=5 // pred_check
      %p449 = pneg %p448
    $region34: #{lora_vit_forward.14} parent=5 // pred_check_branch
      %451 = sbr.rel (%p449) target = $region36
    $region35: #{lora_vit_forward.14} parent=5 // pred_region
      %s452 = ssub.s32 %s8, 2
      // Predicated region
      $region37: #{lora_vit_forward.14} parent=35 // pred_check
        %p453 = pneg %p105
      $region38: #{lora_vit_forward.14} parent=35 // pred_check_branch
        %455 = sbr.rel (%p453) target = $region40
      $region39: #{lora_vit_forward.14} parent=35 // pred_region
        %p456 = scmp.lt.s32.totalorder %s19, 1
        %s457 = scalar_select %p456, %s19, 1
        %p458 = scmp.lt.s32.totalorder %s20, 0
        %s459 = scalar_select %p458, %s20, 0
        %s460 = sadd.s32 %s459, %s457
        %s461 = smul.addr %s460, 4
        %s462 = scalar_lea.vmem %s2, %s461
      $region40: #{lora_vit_forward.14} parent=35 // pred_fallthru
        _
    $region36: #{lora_vit_forward.14} parent=5 // pred_fallthru
      _
  $region6: #{lora_vit_forward.14} parent=0 // loop_footer
    %s12 = sadd.s32 1, %s8
  $region7: #{lora_vit_forward.14} parent=0 // loop_footer_branch
    %7 = sbr.rel target = $region3
  $region8: #{lora_vit_forward.14} parent=0 // loop_exit
    _

// kernel: lora_vit_forward.13
$region0: #{lora_vit_forward.13}
  #allocation0 [shape = 'u32[]', space=smem, size = 0x4, offset = 0x4, fixed_abs, tag = 'smem constant byte address 0x4 - core index']
  #allocation1 [shape = 'u32[144,128]{1,0:T(1,128)}', space=vmem, size = 0x12000, scoped, tag = 'internal scratch']
  %s0 = inlined_call_operand.vmem [shape: f32[16,128], index: 0, kind: input, shape index: {}]
  %s1 = inlined_call_operand.vmem [shape: f32[1,128], index: 1, kind: input, shape index: {}]
  %s2 = inlined_call_operand.vmem [shape: f32[1,128], index: 2, kind: input, shape index: {}]
  %s3 = inlined_call_operand.vmem [shape: bf16[128,384], index: 3, kind: input, shape index: {}]
  %s4 = inlined_call_operand.vmem [shape: f32[1,384], index: 4, kind: input, shape index: {}]
  %s5 = inlined_call_operand.vmem [shape: bf16[16,384], index: 5, kind: output, shape index: {}]
  %s6 = sld [smem:[#allocation0]]
  $region131: #{lora_vit_forward.13} parent=0
    _
  %s8 = ssub.s32 1, %s6
  %s9 = scalar_select 0, %s8, %s6
  $region1: #{lora_vit_forward.13} parent=0
    #allocation2 [shape = 'u8[65536]{0}', space=vmem, size = 0x10000, scoped, tag = 'input window, operand 3']
    #allocation3 [shape = 'u8[8192]{0}', space=vmem, size = 0x2000, scoped, tag = 'output window, operand 0']
    loop: start=0, step=1, limit=5
    $region2: #{lora_vit_forward.13} parent=1 // loop_pre_header
      _
    $region3: #{lora_vit_forward.13} parent=1 // loop_header
      %s11 = sphi 0, %s15
      %p12 = scmp.ge.s32.totalorder %s11, 5
      %s18 = sphi 0, %s30
      %s19 = sphi 0, %s26
      %s20 = sphi 0, %s18
      %s21 = sphi 0, %s19
      %s22 = sphi 0, %s20
      %s23 = sphi 0, %s21
      %s33 = sphi 0, %s35
      %s36 = sphi 0, %s33
      %s37 = sphi 0, %s36
      %s53 = sphi 0, %s37
      %s57 = sphi 0, %s57
      %s59 = sphi 0, %s57
      %s60 = sphi 0, %s59
      %s74 = sphi 0, %s60
      %s78 = sphi 0, %s78
      %s80 = sphi 0, %s78
      %s81 = sphi 0, %s80
      %s95 = sphi 0, %s81
      %s101 = sphi 0, %s103
      %s104 = sphi 0, %s101
      %s105 = sphi 0, %s104
      %s121 = sphi 0, %s105
      %s127 = sphi 0, %s129
      %s130 = sphi 0, %s127
      %s131 = sphi 0, %s130
      %s147 = sphi 0, %s131
      %s155 = sphi 0, %s157
      %s158 = sphi 0, %s155
      %s159 = sphi 0, %s158
      %s175 = sphi 0, %s159
    $region4: #{lora_vit_forward.13} parent=1 // loop_header_branch
      %14 = sbr.rel (%p12) target = $region8
    $region5: #{lora_vit_forward.13} parent=1 // loop_body
      %s16 = ssub.s32 %s11, 1
      %s17 = ssub.s32 %s11, 2
      %s24 = sadd.s32 1, %s19
      %p25 = scmp.ge.s32.totalorder %s24, 3
      %s26 = scalar_select %p25, 0, %s24
      %s27 = sadd.s32 1, %s18
      %s28 = scalar_select %p25, %s27, %s18
      %p29 = scmp.ge.s32.totalorder %s28, 1
      %s30 = scalar_select %p29, 0, %s28
      %s31 = ssub.s32 %s18, %s30
      %p32 = scmp.eq.s32.totalorder %s31, 0
      %s34 = sadd.s32 %s33, 1
      %s35 = scalar_select %p32, %s33, %s34
      %p38 = pneg %p32
      %p39 = scmp.eq.s32.totalorder %s11, 2
      %p40 = por %p38, %p39
      %p41 = scmp.ne.s32.totalorder %s33, %s36
      %p42 = scmp.eq.s32.totalorder %s11, 0
      %p43 = por %p41, %p42
      %p44 = scmp.ne.s32.totalorder %s33, %s36
      %p45 = scmp.eq.s32.totalorder %s16, 2
      %p46 = por %p44, %p45
      %p47 = scmp.ne.s32.totalorder %s36, %s37
      %p48 = scmp.eq.s32.totalorder %s16, 0
      %p49 = por %p47, %p48
      %p50 = scmp.ne.s32.totalorder %s36, %s37
      %p51 = scmp.eq.s32.totalorder %s17, 2
      %p52 = por %p50, %p51
      %p54 = scmp.ne.s32.totalorder %s37, %s53
      %p55 = scmp.eq.s32.totalorder %s17, 0
      %p56 = por %p54, %p55
      %s58 = sadd.s32 %s57, 1
      %p61 = scmp.eq.s32.totalorder %s11, 2
      %p62 = scmp.ne.s32.totalorder %s57, %s59
      %p63 = scmp.eq.s32.totalorder %s11, 0
      %p64 = por %p62, %p63
      %p65 = scmp.ne.s32.totalorder %s57, %s59
      %p66 = scmp.eq.s32.totalorder %s16, 2
      %p67 = por %p65, %p66
      %p68 = scmp.ne.s32.totalorder %s59, %s60
      %p69 = scmp.eq.s32.totalorder %s16, 0
      %p70 = por %p68, %p69
      %p71 = scmp.ne.s32.totalorder %s59, %s60
      %p72 = scmp.eq.s32.totalorder %s17, 2
      %p73 = por %p71, %p72
      %p75 = scmp.ne.s32.totalorder %s60, %s74
      %p76 = scmp.eq.s32.totalorder %s17, 0
      %p77 = por %p75, %p76
      %s79 = sadd.s32 %s78, 1
      %p82 = scmp.eq.s32.totalorder %s11, 2
      %p83 = scmp.ne.s32.totalorder %s78, %s80
      %p84 = scmp.eq.s32.totalorder %s11, 0
      %p85 = por %p83, %p84
      %p86 = scmp.ne.s32.totalorder %s78, %s80
      %p87 = scmp.eq.s32.totalorder %s16, 2
      %p88 = por %p86, %p87
      %p89 = scmp.ne.s32.totalorder %s80, %s81
      %p90 = scmp.eq.s32.totalorder %s16, 0
      %p91 = por %p89, %p90
      %p92 = scmp.ne.s32.totalorder %s80, %s81
      %p93 = scmp.eq.s32.totalorder %s17, 2
      %p94 = por %p92, %p93
      %p96 = scmp.ne.s32.totalorder %s81, %s95
      %p97 = scmp.eq.s32.totalorder %s17, 0
      %p98 = por %p96, %p97
      %s99 = ssub.s32 %s19, %s26
      %p100 = scmp.eq.s32.totalorder %s99, 0
      %s102 = sadd.s32 %s101, 1
      %s103 = scalar_select %p100, %s101, %s102
      %p106 = pneg %p100
      %p107 = scmp.eq.s32.totalorder %s11, 2
      %p108 = por %p106, %p107
      %p109 = scmp.ne.s32.totalorder %s101, %s104
      %p110 = scmp.eq.s32.totalorder %s11, 0
      %p111 = por %p109, %p110
      %p112 = scmp.ne.s32.totalorder %s101, %s104
      %p113 = scmp.eq.s32.totalorder %s16, 2
      %p114 = por %p112, %p113
      %p115 = scmp.ne.s32.totalorder %s104, %s105
      %p116 = scmp.eq.s32.totalorder %s16, 0
      %p117 = por %p115, %p116
      %p118 = scmp.ne.s32.totalorder %s104, %s105
      %p119 = scmp.eq.s32.totalorder %s17, 2
      %p120 = por %p118, %p119
      %p122 = scmp.ne.s32.totalorder %s105, %s121
      %p123 = scmp.eq.s32.totalorder %s17, 0
      %p124 = por %p122, %p123
      %s125 = ssub.s32 %s19, %s26
      %p126 = scmp.eq.s32.totalorder %s125, 0
      %s128 = sadd.s32 %s127, 1
      %s129 = scalar_select %p126, %s127, %s128
      %p132 = pneg %p126
      %p133 = scmp.eq.s32.totalorder %s11, 2
      %p134 = por %p132, %p133
      %p135 = scmp.ne.s32.totalorder %s127, %s130
      %p136 = scmp.eq.s32.totalorder %s11, 0
      %p137 = por %p135, %p136
      %p138 = scmp.ne.s32.totalorder %s127, %s130
      %p139 = scmp.eq.s32.totalorder %s16, 2
      %p140 = por %p138, %p139
      %p141 = scmp.ne.s32.totalorder %s130, %s131
      %p142 = scmp.eq.s32.totalorder %s16, 0
      %p143 = por %p141, %p142
      %p144 = scmp.ne.s32.totalorder %s130, %s131
      %p145 = scmp.eq.s32.totalorder %s17, 2
      %p146 = por %p144, %p145
      %p148 = scmp.ne.s32.totalorder %s131, %s147
      %p149 = scmp.eq.s32.totalorder %s17, 0
      %p150 = por %p148, %p149
      %s151 = ssub.s32 %s18, %s30
      %s152 = ssub.s32 %s19, %s26
      %s153 = sor.u32 %s151, %s152
      %p154 = scmp.eq.s32.totalorder %s153, 0
      %s156 = sadd.s32 %s155, 1
      %s157 = scalar_select %p154, %s155, %s156
      %p160 = pneg %p154
      %p161 = scmp.eq.s32.totalorder %s11, 2
      %p162 = por %p160, %p161
      %p163 = scmp.ne.s32.totalorder %s155, %s158
      %p164 = scmp.eq.s32.totalorder %s11, 0
      %p165 = por %p163, %p164
      %p166 = scmp.ne.s32.totalorder %s155, %s158
      %p167 = scmp.eq.s32.totalorder %s16, 2
      %p168 = por %p166, %p167
      %p169 = scmp.ne.s32.totalorder %s158, %s159
      %p170 = scmp.eq.s32.totalorder %s16, 0
      %p171 = por %p169, %p170
      %p172 = scmp.ne.s32.totalorder %s158, %s159
      %p173 = scmp.eq.s32.totalorder %s17, 2
      %p174 = por %p172, %p173
      %p176 = scmp.ne.s32.totalorder %s159, %s175
      %p177 = scmp.eq.s32.totalorder %s17, 0
      %p178 = por %p176, %p177
      %p179 = scmp.le.s32.totalorder 1, %s11
      %p180 = scmp.lt.s32.totalorder %s11, 4
      %p181 = pnand %p179, %p180
      %p182 = pneg %p181
      // Predicated region
      $region9: #{lora_vit_forward.13} parent=5 // pred_check
        _
      $region10: #{lora_vit_forward.13} parent=5 // pred_check_branch
        %184 = sbr.rel (%p181) target = $region12
      $region11: #{lora_vit_forward.13} parent=5 // pred_region
        %s185 = ssub.s32 %s11, 1
        // Predicated region
        $region13: #{lora_vit_forward.13} parent=11 // pred_check
          %p186 = pneg %p49
        $region14: #{lora_vit_forward.13} parent=11 // pred_check_branch
          %188 = sbr.rel (%p186) target = $region16
        $region15: #{lora_vit_forward.13} parent=11 // pred_region
          %s189 = smul.u32 2, %s20
          %p190 = scmp.lt.s32.totalorder %s189, 1
          %s191 = scalar_select %p190, %s189, 1
          %s192 = smul.addr %s191, 8
          %s193 = scalar_lea.vmem %s0, %s192
          %s194 = smul.u32 2, %s20
        $region16: #{lora_vit_forward.13} parent=11 // pred_fallthru
          _
        // Predicated region
        $region17: #{lora_vit_forward.13} parent=11 // pred_check
          %p195 = pneg %p70
        $region18: #{lora_vit_forward.13} parent=11 // pred_check_branch
          %197 = sbr.rel (%p195) target = $region20
        $region19: #{lora_vit_forward.13} parent=11 // pred_region
          _
        $region20: #{lora_vit_forward.13} parent=11 // pred_fallthru
          _
        // Predicated region
        $region21: #{lora_vit_forward.13} parent=11 // pred_check
          %p198 = pneg %p91
        $region22: #{lora_vit_forward.13} parent=11 // pred_check_branch
          %200 = sbr.rel (%p198) target = $region24
        $region23: #{lora_vit_forward.13} parent=11 // pred_region
          _
        $region24: #{lora_vit_forward.13} parent=11 // pred_fallthru
          _
      $region12: #{lora_vit_forward.13} parent=5 // pred_fallthru
        _
      %p201 = scmp.lt.s32.totalorder %s11, 3
      // Predicated region
      $region25: #{lora_vit_forward.13} parent=5 // pred_check
        %p202 = pneg %p201
      $region26: #{lora_vit_forward.13} parent=5 // pred_check_branch
        %204 = sbr.rel (%p202) target = $region28
      $region27: #{lora_vit_forward.13} parent=5 // pred_region
        // Predicated region
        $region29: #{lora_vit_forward.13} parent=27 // pred_check
          %p205 = pneg %p111
        $region30: #{lora_vit_forward.13} parent=27 // pred_check_branch
          %207 = sbr.rel (%p205) target = $region32
        $region31: #{lora_vit_forward.13} parent=27 // pred_region
          %s208 = sand.u32 %s101, 1
          %s209 = sand.u32 %s101, 1
          %s210 = smul.addr %s209, 64
          %s211 = scalar_lea.vmem [#allocation2], %s210
          %s212 = smul.addr %s19, 4
          %s213 = scalar_lea.vmem %s3, %s212
          // Predicated region
          $region33: #{lora_vit_forward.13} parent=31 // pred_check
            _
          $region34: #{lora_vit_forward.13} parent=31 // pred_check_branch
            %215 = sbr.rel (0) target = $region36
          $region35: #{lora_vit_forward.13} parent=31 // pred_region
            // Predicated region
            $region37: #{lora_vit_forward.13} parent=35 // pred_check
              _
            $region38: #{lora_vit_forward.13} parent=35 // pred_check_branch
              %217 = sbr.rel target = $region40
            $region39: #{lora_vit_forward.13} parent=35 // pred_region
              // Predicated region
              $region52: #{lora_vit_forward.13} parent=39 // pred_check
                _
              $region53: #{lora_vit_forward.13} parent=39 // pred_check_branch
                %262 = sbr.rel (0) target = $region55
              $region54: #{lora_vit_forward.13} parent=39 // pred_region
                loop: start=0, step=1, limit=1
                $region56: #{lora_vit_forward.13} parent=54 // loop_pre_header
                  _
                $region57: #{lora_vit_forward.13} parent=54 // loop_header
                  %s264 = sphi 0, %s268
                  %p265 = scmp.ge.s32.totalorder %s264, 1
                  %s269 = sphi %s213, %s213
                  %s270 = sphi %s211, %s211
                $region58: #{lora_vit_forward.13} parent=54 // loop_header_branch
                  %267 = sbr.rel (%p265) target = $region62
                $region59: #{lora_vit_forward.13} parent=54 // loop_body
                  _
                $region60: #{lora_vit_forward.13} parent=54 // loop_footer
                  %s268 = sadd.s32 1, %s264
                $region61: #{lora_vit_forward.13} parent=54 // loop_footer_branch
                  %263 = sbr.rel target = $region57
                $region62: #{lora_vit_forward.13} parent=54 // loop_exit
                  _
                loop: start=0, step=1, limit=1
                $region63: #{lora_vit_forward.13} parent=54 // loop_pre_header
                  _
                $region64: #{lora_vit_forward.13} parent=54 // loop_header
                  %s273 = sphi 0, %s277
                  %p274 = scmp.ge.s32.totalorder %s273, 1
                  %s278 = sphi %s213, %s213
                  %s279 = sphi %s211, %s211
                $region65: #{lora_vit_forward.13} parent=54 // loop_header_branch
                  %276 = sbr.rel (%p274) target = $region69
                $region66: #{lora_vit_forward.13} parent=54 // loop_body
                  %v280 = vld [vmem:[%s278] sm:$0xf]
                  %281 = vst [vmem:[%s279] sm:$0xf] %v280
                  %v282 = vld [vmem:[%s278 + $0xc] sm:$0xf]
                  %283 = vst [vmem:[%s279 + $0x4] sm:$0xf] %v282
                  %v284 = vld [vmem:[%s278 + $0x18] sm:$0xf]
                  %285 = vst [vmem:[%s279 + $0x8] sm:$0xf] %v284
                  %v286 = vld [vmem:[%s278 + $0x24] sm:$0xf]
                  %287 = vst [vmem:[%s279 + $0xc] sm:$0xf] %v286
                  %v288 = vld [vmem:[%s278 + $0x30] sm:$0xf]
                  %289 = vst [vmem:[%s279 + $0x10] sm:$0xf] %v288
                  %v290 = vld [vmem:[%s278 + $0x3c] sm:$0xf]
                  %291 = vst [vmem:[%s279 + $0x14] sm:$0xf] %v290
                  %v292 = vld [vmem:[%s278 + $0x48] sm:$0xf]
                  %293 = vst [vmem:[%s279 + $0x18] sm:$0xf] %v292
                  %v294 = vld [vmem:[%s278 + $0x54] sm:$0xf]
                  %295 = vst [vmem:[%s279 + $0x1c] sm:$0xf] %v294
                  %v296 = vld [vmem:[%s278 + $0x60] sm:$0xf]
                  %297 = vst [vmem:[%s279 + $0x20] sm:$0xf] %v296
                  %v298 = vld [vmem:[%s278 + $0x6c] sm:$0xf]
                  %299 = vst [vmem:[%s279 + $0x24] sm:$0xf] %v298
                  %v300 = vld [vmem:[%s278 + $0x78] sm:$0xf]
                  %301 = vst [vmem:[%s279 + $0x28] sm:$0xf] %v300
                  %v302 = vld [vmem:[%s278 + $0x84] sm:$0xf]
                  %303 = vst [vmem:[%s279 + $0x2c] sm:$0xf] %v302
                  %v304 = vld [vmem:[%s278 + $0x90] sm:$0xf]
                  %305 = vst [vmem:[%s279 + $0x30] sm:$0xf] %v304
                  %v306 = vld [vmem:[%s278 + $0x9c] sm:$0xf]
                  %307 = vst [vmem:[%s279 + $0x34] sm:$0xf] %v306
                  %v308 = vld [vmem:[%s278 + $0xa8] sm:$0xf]
                  %309 = vst [vmem:[%s279 + $0x38] sm:$0xf] %v308
                  %v310 = vld [vmem:[%s278 + $0xb4] sm:$0xf]
                  %311 = vst [vmem:[%s279 + $0x3c] sm:$0xf] %v310
                $region67: #{lora_vit_forward.13} parent=54 // loop_footer
                  %s277 = sadd.s32 1, %s273
                $region68: #{lora_vit_forward.13} parent=54 // loop_footer_branch
                  %272 = sbr.rel target = $region64
                $region69: #{lora_vit_forward.13} parent=54 // loop_exit
                  _
              $region55: #{lora_vit_forward.13} parent=39 // pred_fallthru
                _
            $region40: #{lora_vit_forward.13} parent=35 // pred_fallthru
              _
            // Predicated region
            $region41: #{lora_vit_forward.13} parent=35 // pred_check
              _
            $region42: #{lora_vit_forward.13} parent=35 // pred_check_branch
              %219 = sbr.rel (0) target = $region44
            $region43: #{lora_vit_forward.13} parent=35 // pred_region
              loop: start=0, step=1, limit=1
              $region45: #{lora_vit_forward.13} parent=43 // loop_pre_header
                _
              $region46: #{lora_vit_forward.13} parent=43 // loop_header
                %s222 = sphi 0, %s226
                %p223 = scmp.ge.s32.totalorder %s222, 1
                %s227 = sphi %s213, %s213
                %s228 = sphi %s211, %s211
              $region47: #{lora_vit_forward.13} parent=43 // loop_header_branch
                %225 = sbr.rel (%p223) target = $region51
              $region48: #{lora_vit_forward.13} parent=43 // loop_body
                %v229 = vld [vmem:[%s227] sm:$0xf]
                %230 = vst [vmem:[%s228] sm:$0xf] %v229
                %v231 = vld [vmem:[%s227 + $0xc] sm:$0xf]
                %232 = vst [vmem:[%s228 + $0x4] sm:$0xf] %v231
                %v233 = vld [vmem:[%s227 + $0x18] sm:$0xf]
                %234 = vst [vmem:[%s228 + $0x8] sm:$0xf] %v233
                %v235 = vld [vmem:[%s227 + $0x24] sm:$0xf]
                %236 = vst [vmem:[%s228 + $0xc] sm:$0xf] %v235
                %v237 = vld [vmem:[%s227 + $0x30] sm:$0xf]
                %238 = vst [vmem:[%s228 + $0x10] sm:$0xf] %v237
                %v239 = vld [vmem:[%s227 + $0x3c] sm:$0xf]
                %240 = vst [vmem:[%s228 + $0x14] sm:$0xf] %v239
                %v241 = vld [vmem:[%s227 + $0x48] sm:$0xf]
                %242 = vst [vmem:[%s228 + $0x18] sm:$0xf] %v241
                %v243 = vld [vmem:[%s227 + $0x54] sm:$0xf]
                %244 = vst [vmem:[%s228 + $0x1c] sm:$0xf] %v243
                %v245 = vld [vmem:[%s227 + $0x60] sm:$0xf]
                %246 = vst [vmem:[%s228 + $0x20] sm:$0xf] %v245
                %v247 = vld [vmem:[%s227 + $0x6c] sm:$0xf]
                %248 = vst [vmem:[%s228 + $0x24] sm:$0xf] %v247
                %v249 = vld [vmem:[%s227 + $0x78] sm:$0xf]
                %250 = vst [vmem:[%s228 + $0x28] sm:$0xf] %v249
                %v251 = vld [vmem:[%s227 + $0x84] sm:$0xf]
                %252 = vst [vmem:[%s228 + $0x2c] sm:$0xf] %v251
                %v253 = vld [vmem:[%s227 + $0x90] sm:$0xf]
                %254 = vst [vmem:[%s228 + $0x30] sm:$0xf] %v253
                %v255 = vld [vmem:[%s227 + $0x9c] sm:$0xf]
                %256 = vst [vmem:[%s228 + $0x34] sm:$0xf] %v255
                %v257 = vld [vmem:[%s227 + $0xa8] sm:$0xf]
                %258 = vst [vmem:[%s228 + $0x38] sm:$0xf] %v257
                %v259 = vld [vmem:[%s227 + $0xb4] sm:$0xf]
                %260 = vst [vmem:[%s228 + $0x3c] sm:$0xf] %v259
              $region49: #{lora_vit_forward.13} parent=43 // loop_footer
                %s226 = sadd.s32 1, %s222
              $region50: #{lora_vit_forward.13} parent=43 // loop_footer_branch
                %221 = sbr.rel target = $region46
              $region51: #{lora_vit_forward.13} parent=43 // loop_exit
                _
            $region44: #{lora_vit_forward.13} parent=35 // pred_fallthru
              _
          $region36: #{lora_vit_forward.13} parent=31 // pred_fallthru
            _
          %312 = vnop
        $region32: #{lora_vit_forward.13} parent=27 // pred_fallthru
          _
        // Predicated region
        $region70: #{lora_vit_forward.13} parent=27 // pred_check
          %p313 = pneg %p137
        $region71: #{lora_vit_forward.13} parent=27 // pred_check_branch
          %315 = sbr.rel (%p313) target = $region73
        $region72: #{lora_vit_forward.13} parent=27 // pred_region
          %p316 = scmp.lt.s32.totalorder %s19, 2
          %s317 = scalar_select %p316, %s19, 2
          %s318 = scalar_lea.vmem %s4, %s317
        $region73: #{lora_vit_forward.13} parent=27 // pred_fallthru
          _
      $region28: #{lora_vit_forward.13} parent=5 // pred_fallthru
        _
      %p319 = scmp.le.s32.totalorder 1, %s11
      %p320 = scmp.lt.s32.totalorder %s11, 4
      %p321 = pnand %p319, %p320
      %p322 = pneg %p321
      // Predicated region
      $region74: #{lora_vit_forward.13} parent=5 // pred_check
        _
      $region75: #{lora_vit_forward.13} parent=5 // pred_check_branch
        %324 = sbr.rel (%p321) target = $region77
      $region76: #{lora_vit_forward.13} parent=5 // pred_region
        %s325 = ssub.s32 %s11, 1
        %s326 = sand.u32 %s104, 1
        %s327 = sand.u32 %s104, 1
        %s328 = smul.addr %s327, 64
        %s329 = scalar_lea.vmem [#allocation2], %s328
        // Predicated region
        $region78: #{lora_vit_forward.13} parent=76 // pred_check
          %p330 = pneg %p117
        $region79: #{lora_vit_forward.13} parent=76 // pred_check_branch
          %332 = sbr.rel (%p330) target = $region81
        $region80: #{lora_vit_forward.13} parent=76 // pred_region
          _
        $region81: #{lora_vit_forward.13} parent=76 // pred_fallthru
          _
        %s333 = smul.u32 2, %s20
        %p334 = scmp.lt.s32.totalorder %s333, 1
        %s335 = scalar_select %p334, %s333, 1
        %s336 = smul.addr %s335, 8
        %s337 = scalar_lea.vmem %s0, %s336
        %p338 = pneg %p49
        %p339 = pneg %p46
        %p340 = pneg %p70
        %p341 = pneg %p67
        %p342 = pneg %p91
        %p343 = pneg %p88
        %s344 = sand.u32 %s104, 1
        %s345 = sand.u32 %s104, 1
        %s346 = smul.addr %s345, 64
        %s347 = scalar_lea.vmem [#allocation2], %s346
        %p348 = pneg %p117
        %p349 = pneg %p114
        %p350 = scmp.lt.s32.totalorder %s21, 2
        %s351 = scalar_select %p350, %s21, 2
        %s352 = scalar_lea.vmem %s4, %s351
        %p353 = pneg %p143
        %p354 = pneg %p140
        %p355 = pneg %p171
        %p356 = pneg %p168
        %s357 = sand.u32 %s158, 1
        %s358 = sand.u32 %s158, 1
        %s359 = smul.addr %s358, 8
        %s360 = scalar_lea.vmem [#allocation3], %s359
        %s361 = smul.u32 2, %s20
        %p362 = scmp.lt.s32.totalorder %s361, 1
        %s363 = scalar_select %p362, %s361, 1
        %s364 = smul.addr %s363, 8
        %s365 = scalar_lea.vmem %s0, %s364
        %s366 = smul.u32 2, %s20
        %p367 = scmp.lt.s32.totalorder %s21, 2
        %s368 = scalar_select %p367, %s21, 2
        %s369 = scalar_lea.vmem %s4, %s368
        %s370 = smul.u32 2, %s20
        %v372 = vld [vmem:[%s365] sm:$0xff]
        %v373 = vld [vmem:[%s365 + $0x8] sm:$0xff]
        %374 = vadd.xlane.f32.xlu0 %v372
        %v375 = vpop.xlane.xlu0 %374
        %376 = vadd.xlane.f32.xlu0 %v373
        %v377 = vpop.xlane.xlu0 %376
        %v378 = vmul.f32 %v375, 0.0078125
        %v379 = vmul.f32 %v377, 0.0078125
        %v380 = vmul.f32 %v372, %v372
        %v381 = vmul.f32 %v373, %v373
        %382 = vadd.xlane.f32.xlu0 %v380
        %v383 = vpop.xlane.xlu0 %382
        %384 = vadd.xlane.f32.xlu0 %v381
        %v385 = vpop.xlane.xlu0 %384
        %v386 = vmul.f32 %v383, 0.0078125
        %v387 = vmul.f32 %v385, 0.0078125
        %v388 = vmul.f32 %v378, %v378
        %v389 = vmul.f32 %v379, %v379
        %v390 = vsub.f32 %v386, %v388
        %v391 = vsub.f32 %v387, %v389
        %v392 = vsub.f32 %v372, %v378
        %v393 = vsub.f32 %v373, %v379
        %v394 = vadd.f32 %v390, 1e-06
        %v395 = vadd.f32 %v391, 1e-06
        %v396 = vrsqrt.pop %v394
        %v397 = vrsqrt.pop %v395
        %v398 = vmul.f32 %v392, %v396
        %v399 = vmul.f32 %v393, %v397
        %v400 = vld [vmem:[%s1] sm:$0x1]
        %v402 = vlaneseq
        %v403 = vshrl.u32 %v402, 7
        %v404 = vsub.s32 0, %v403
        %v405 = vrot.slane %v400, %v404
        %v407 = vmul.f32 %v398, %v405
        %v408 = vmul.f32 %v399, %v405
        %v409 = vld [vmem:[%s2] sm:$0x1]
        %v411 = vlaneseq
        %v412 = vshrl.u32 %v411, 7
        %v413 = vsub.s32 0, %v412
        %v414 = vrot.slane %v409, %v413
        %v416 = vadd.f32 %v407, %v414
        %v417 = vadd.f32 %v408, %v414
        %v418 = vpack.c.bf16 %v417, %v416
        %v419 = vld [vmem:[%s329] sm:$0xf]
        %v420 = vld [vmem:[%s329 + $0x4] sm:$0xf]
        %v421 = vld [vmem:[%s329 + $0x8] sm:$0xf]
        %v422 = vld [vmem:[%s329 + $0xc] sm:$0xf]
        %v423 = vld [vmem:[%s329 + $0x10] sm:$0xf]
        %v424 = vld [vmem:[%s329 + $0x14] sm:$0xf]
        %v425 = vld [vmem:[%s329 + $0x18] sm:$0xf]
        %v426 = vld [vmem:[%s329 + $0x1c] sm:$0xf]
        %v427 = vld [vmem:[%s329 + $0x20] sm:$0xf]
        %v428 = vld [vmem:[%s329 + $0x24] sm:$0xf]
        %v429 = vld [vmem:[%s329 + $0x28] sm:$0xf]
        %v430 = vld [vmem:[%s329 + $0x2c] sm:$0xf]
        %v431 = vld [vmem:[%s329 + $0x30] sm:$0xf]
        %v432 = vld [vmem:[%s329 + $0x34] sm:$0xf]
        %v433 = vld [vmem:[%s329 + $0x38] sm:$0xf]
        %v434 = vld [vmem:[%s329 + $0x3c] sm:$0xf]
        %v435 = vld [vmem:[%s369] sm:$0x1]
        %v437 = vlaneseq
        %v438 = vshrl.u32 %v437, 7
        %v439 = vsub.s32 0, %v438
        %v440 = vrot.slane %v435, %v439
        %v458 = vunpack.c.l.b16 %v419
        %v459 = vunpack.c.l.b16 %v420
        %v460 = vunpack.c.l.b16 %v421
        %v461 = vunpack.c.l.b16 %v422
        %v462 = vunpack.c.l.b16 %v423
        %v463 = vunpack.c.l.b16 %v424
        %v464 = vunpack.c.l.b16 %v425
        %v465 = vunpack.c.l.b16 %v426
        %v466 = vunpack.c.l.b16 %v427
        %v467 = vunpack.c.l.b16 %v428
        %v468 = vunpack.c.l.b16 %v429
        %v469 = vunpack.c.l.b16 %v430
        %v470 = vunpack.c.l.b16 %v431
        %v471 = vunpack.c.l.b16 %v432
        %v472 = vunpack.c.l.b16 %v433
        %v473 = vunpack.c.l.b16 %v434
        %v474 = vpack.c.b16 %v459, %v458
        %v475 = vpack.c.b16 %v461, %v460
        %v476 = vpack.c.b16 %v463, %v462
        %v477 = vpack.c.b16 %v465, %v464
        %v478 = vpack.c.b16 %v467, %v466
        %v479 = vpack.c.b16 %v469, %v468
        %v480 = vpack.c.b16 %v471, %v470
        %v481 = vpack.c.b16 %v473, %v472
        %490 = vmatprep.subr.bf16.mxu0 0
        %491 = vmatpush1.bf16.msra.mxu0 %v474
        %492 = vmatprep.subr.bf16.mxu0 0
        %493 = vmatpush1.bf16.msra.mxu0 %v475
        %494 = vmatprep.subr.bf16.mxu0 0
        %495 = vmatpush1.bf16.msra.mxu0 %v476
        %496 = vmatprep.subr.bf16.mxu0 0
        %497 = vmatpush1.bf16.msra.mxu0 %v477
        %498 = vmatprep.subr.bf16.mxu0 0
        %499 = vmatpush1.bf16.msra.mxu0 %v478
        %500 = vmatprep.subr.bf16.mxu0 0
        %501 = vmatpush1.bf16.msra.mxu0 %v479
        %502 = vmatprep.subr.bf16.mxu0 0
        %503 = vmatpush1.bf16.msra.mxu0 %v480
        %504 = vmatprep.subr.bf16.mxu0 0
        %505 = vmatpush1.bf16.msra.mxu0 %v481
        %506 = vmatprep.subr.bf16.mxu0 0
        %507 = vmatpush1.bf16.msra.mxu0 0
        %508 = vmatprep.subr.bf16.mxu0 0
        %509 = vmatpush1.bf16.msra.mxu0 0
        %510 = vmatprep.subr.bf16.mxu0 0
        %511 = vmatpush1.bf16.msra.mxu0 0
        %512 = vmatprep.subr.bf16.mxu0 0
        %513 = vmatpush1.bf16.msra.mxu0 0
        %514 = vmatprep.subr.bf16.mxu0 0
        %515 = vmatpush1.bf16.msra.mxu0 0
        %516 = vmatprep.subr.bf16.mxu0 0
        %517 = vmatpush1.bf16.msra.mxu0 0
        %518 = vmatprep.subr.bf16.mxu0 0
        %519 = vmatpush1.bf16.msra.mxu0 0
        %520 = vmatprep.subr.bf16.mxu0 0
        %521 = vmatpush1.bf16.msra.mxu0 0
        %522 = vmatprep.mubr.bf16.mxu0 0
        %523 = vmatmul.mubr.bf16.gmra.mrb[0].mxu0 %v418
        %v524 = vpop.f32.mrb[0].mxu0
        %v525 = vadd.f32 %v440, %v524
        %v526 = vpop.f32.mrb[0].mxu0
        %v527 = vpop.f32.mrb[0].mxu0
        %v528 = vadd.f32 %v440, %v527
        %v529 = vpop.f32.mrb[0].mxu0
        %530 = vdwg.mxu0
        %v531 = vpack.c.bf16 %v528, %v525
        %v533 = vunpack.c.l.b16 %v531
        %v534 = vunpack.c.h.b16 %v531
        %v535 = vpack.c.b16 %v533, %v533
        %v536 = vpack.c.b16 %v534, %v534
        %539 = vst [vmem:[%s360] sm:$0xf] %v535
        %540 = vst [vmem:[%s360 + $0x4] sm:$0xf] %v536
        %s541 = sand.u32 %s158, 1
        %s542 = sand.u32 %s158, 1
        %s543 = smul.addr %s542, 8
        %s544 = scalar_lea.vmem [#allocation3], %s543
        // Predicated region
        $region82: #{lora_vit_forward.13} parent=76 // pred_check
          %p545 = pneg %p168
        $region83: #{lora_vit_forward.13} parent=76 // pred_check_branch
          %547 = sbr.rel (%p545) target = $region85
        $region84: #{lora_vit_forward.13} parent=76 // pred_region
          %s548 = smul.u32 2, %s20
          %s549 = smul.addr %s548, 3
          %s550 = sadd.s32 %s21, %s549
          %s551 = smul.addr %s550, 4
          %s552 = scalar_lea.vmem %s5, %s551
          // Predicated region
          $region86: #{lora_vit_forward.13} parent=84 // pred_check
            _
          $region87: #{lora_vit_forward.13} parent=84 // pred_check_branch
            %554 = sbr.rel (0) target = $region89
          $region88: #{lora_vit_forward.13} parent=84 // pred_region
            // Predicated region
            $region90: #{lora_vit_forward.13} parent=88 // pred_check
              _
            $region91: #{lora_vit_forward.13} parent=88 // pred_check_branch
              %556 = sbr.rel target = $region93
            $region92: #{lora_vit_forward.13} parent=88 // pred_region
              // Predicated region
              $region105: #{lora_vit_forward.13} parent=92 // pred_check
                _
              $region106: #{lora_vit_forward.13} parent=92 // pred_check_branch
                %573 = sbr.rel (0) target = $region108
              $region107: #{lora_vit_forward.13} parent=92 // pred_region
                loop: start=0, step=1, limit=1
                $region109: #{lora_vit_forward.13} parent=107 // loop_pre_header
                  _
                $region110: #{lora_vit_forward.13} parent=107 // loop_header
                  %s575 = sphi 0, %s579
                  %p576 = scmp.ge.s32.totalorder %s575, 1
                  %s580 = sphi %s544, %s544
                  %s581 = sphi %s552, %s552
                $region111: #{lora_vit_forward.13} parent=107 // loop_header_branch
                  %578 = sbr.rel (%p576) target = $region115
                $region112: #{lora_vit_forward.13} parent=107 // loop_body
                  _
                $region113: #{lora_vit_forward.13} parent=107 // loop_footer
                  %s579 = sadd.s32 1, %s575
                $region114: #{lora_vit_forward.13} parent=107 // loop_footer_branch
                  %574 = sbr.rel target = $region110
                $region115: #{lora_vit_forward.13} parent=107 // loop_exit
                  _
                loop: start=0, step=1, limit=1
                $region116: #{lora_vit_forward.13} parent=107 // loop_pre_header
                  _
                $region117: #{lora_vit_forward.13} parent=107 // loop_header
                  %s584 = sphi 0, %s588
                  %p585 = scmp.ge.s32.totalorder %s584, 1
                  %s589 = sphi %s544, %s544
                  %s590 = sphi %s552, %s552
                $region118: #{lora_vit_forward.13} parent=107 // loop_header_branch
                  %587 = sbr.rel (%p585) target = $region122
                $region119: #{lora_vit_forward.13} parent=107 // loop_body
                  %v591 = vld [vmem:[%s589] sm:$0xf]
                  %592 = vst [vmem:[%s590] sm:$0xf] %v591
                  %v593 = vld [vmem:[%s589 + $0x4] sm:$0xf]
                  %594 = vst [vmem:[%s590 + $0xc] sm:$0xf] %v593
                $region120: #{lora_vit_forward.13} parent=107 // loop_footer
                  %s588 = sadd.s32 1, %s584
                $region121: #{lora_vit_forward.13} parent=107 // loop_footer_branch
                  %583 = sbr.rel target = $region117
                $region122: #{lora_vit_forward.13} parent=107 // loop_exit
                  _
              $region108: #{lora_vit_forward.13} parent=92 // pred_fallthru
                _
            $region93: #{lora_vit_forward.13} parent=88 // pred_fallthru
              _
            // Predicated region
            $region94: #{lora_vit_forward.13} parent=88 // pred_check
              _
            $region95: #{lora_vit_forward.13} parent=88 // pred_check_branch
              %558 = sbr.rel (0) target = $region97
            $region96: #{lora_vit_forward.13} parent=88 // pred_region
              loop: start=0, step=1, limit=1
              $region98: #{lora_vit_forward.13} parent=96 // loop_pre_header
                _
              $region99: #{lora_vit_forward.13} parent=96 // loop_header
                %s561 = sphi 0, %s565
                %p562 = scmp.ge.s32.totalorder %s561, 1
                %s566 = sphi %s544, %s544
                %s567 = sphi %s552, %s552
              $region100: #{lora_vit_forward.13} parent=96 // loop_header_branch
                %564 = sbr.rel (%p562) target = $region104
              $region101: #{lora_vit_forward.13} parent=96 // loop_body
                %v568 = vld [vmem:[%s566] sm:$0xf]
                %569 = vst [vmem:[%s567] sm:$0xf] %v568
                %v570 = vld [vmem:[%s566 + $0x4] sm:$0xf]
                %571 = vst [vmem:[%s567 + $0xc] sm:$0xf] %v570
              $region102: #{lora_vit_forward.13} parent=96 // loop_footer
                %s565 = sadd.s32 1, %s561
              $region103: #{lora_vit_forward.13} parent=96 // loop_footer_branch
                %560 = sbr.rel target = $region99
              $region104: #{lora_vit_forward.13} parent=96 // loop_exit
                _
            $region97: #{lora_vit_forward.13} parent=88 // pred_fallthru
              _
          $region89: #{lora_vit_forward.13} parent=84 // pred_fallthru
            _
          %595 = vnop
        $region85: #{lora_vit_forward.13} parent=76 // pred_fallthru
          _
      $region77: #{lora_vit_forward.13} parent=5 // pred_fallthru
        _
      %p596 = scmp.le.s32.totalorder 2, %s11
      // Predicated region
      $region123: #{lora_vit_forward.13} parent=5 // pred_check
        %p597 = pneg %p596
      $region124: #{lora_vit_forward.13} parent=5 // pred_check_branch
        %599 = sbr.rel (%p597) target = $region126
      $region125: #{lora_vit_forward.13} parent=5 // pred_region
        %s600 = ssub.s32 %s11, 2
        // Predicated region
        $region127: #{lora_vit_forward.13} parent=125 // pred_check
          %p601 = pneg %p174
        $region128: #{lora_vit_forward.13} parent=125 // pred_check_branch
          %603 = sbr.rel (%p601) target = $region130
        $region129: #{lora_vit_forward.13} parent=125 // pred_region
          %s604 = sand.u32 %s159, 1
          %s605 = sand.u32 %s159, 1
          %s606 = smul.addr %s605, 8
          %s607 = scalar_lea.vmem [#allocation3], %s606
        $region130: #{lora_vit_forward.13} parent=125 // pred_fallthru
          _
      $region126: #{lora_vit_forward.13} parent=5 // pred_fallthru
        _
    $region6: #{lora_vit_forward.13} parent=1 // loop_footer
      %s15 = sadd.s32 1, %s11
    $region7: #{lora_vit_forward.13} parent=1 // loop_footer_branch
      %10 = sbr.rel target = $region3
    $region8: #{lora_vit_forward.13} parent=1 // loop_exit
      _

// kernel: lora_vit_forward.12
$region0: #{lora_vit_forward.12}
  #allocation0 [shape = 'u32[]', space=smem, size = 0x4, offset = 0x4, fixed_abs, tag = 'smem constant byte address 0x4 - core index']
  #allocation1 [shape = 'u32[144,128]{1,0:T(1,128)}', space=vmem, size = 0x12000, scoped, tag = 'internal scratch']
  %s0 = inlined_call_operand.vmem [shape: f32[8,256], index: 0, kind: input, shape index: {}]
  %s1 = inlined_call_operand.vmem [shape: bf16[256,128], index: 1, kind: input, shape index: {}]
  %s2 = inlined_call_operand.vmem [shape: f32[1,128], index: 2, kind: input, shape index: {}]
  %s3 = inlined_call_operand.vmem [shape: f32[8,128], index: 3, kind: output, shape index: {}]
  %s4 = sld [smem:[#allocation0]]
  $region22: #{lora_vit_forward.12} parent=0
    _
  %s6 = ssub.s32 1, %s4
  %s7 = scalar_select 0, %s6, %s4
  // Predicated region
  $region2: #{lora_vit_forward.12} parent=0 // pred_check
    _
  $region3: #{lora_vit_forward.12} parent=0 // pred_check_branch
    %9 = sbr.rel (0) target = $region5
  $region4: #{lora_vit_forward.12} parent=0 // pred_region
    _
  $region5: #{lora_vit_forward.12} parent=0 // pred_fallthru
    _
  // Predicated region
  $region6: #{lora_vit_forward.12} parent=0 // pred_check
    _
  $region7: #{lora_vit_forward.12} parent=0 // pred_check_branch
    %11 = sbr.rel (0) target = $region9
  $region8: #{lora_vit_forward.12} parent=0 // pred_region
    _
  $region9: #{lora_vit_forward.12} parent=0 // pred_fallthru
    _
  // Predicated region
  $region10: #{lora_vit_forward.12} parent=0 // pred_check
    _
  $region11: #{lora_vit_forward.12} parent=0 // pred_check_branch
    %13 = sbr.rel (0) target = $region13
  $region12: #{lora_vit_forward.12} parent=0 // pred_region
    _
  $region13: #{lora_vit_forward.12} parent=0 // pred_fallthru
    _
  %v15 = vld [vmem:[%s0] sm:$0xff]
  %v16 = vld [vmem:[%s0 + $0x8] sm:$0xff]
  %v17 = vpack.c.bf16 %v15, %v15
  %v18 = vpack.c.bf16 %v16, %v16
  %v19 = vld [vmem:[%s1] sm:$0xf]
  %v20 = vld [vmem:[%s1 + $0x4] sm:$0xf]
  %v21 = vld [vmem:[%s1 + $0x8] sm:$0xf]
  %v22 = vld [vmem:[%s1 + $0xc] sm:$0xf]
  %v23 = vld [vmem:[%s1 + $0x10] sm:$0xf]
  %v24 = vld [vmem:[%s1 + $0x14] sm:$0xf]
  %v25 = vld [vmem:[%s1 + $0x18] sm:$0xf]
  %v26 = vld [vmem:[%s1 + $0x1c] sm:$0xf]
  %v27 = vld [vmem:[%s1 + $0x20] sm:$0xf]
  %v28 = vld [vmem:[%s1 + $0x24] sm:$0xf]
  %v29 = vld [vmem:[%s1 + $0x28] sm:$0xf]
  %v30 = vld [vmem:[%s1 + $0x2c] sm:$0xf]
  %v31 = vld [vmem:[%s1 + $0x30] sm:$0xf]
  %v32 = vld [vmem:[%s1 + $0x34] sm:$0xf]
  %v33 = vld [vmem:[%s1 + $0x38] sm:$0xf]
  %v34 = vld [vmem:[%s1 + $0x3c] sm:$0xf]
  %v35 = vld [vmem:[%s1 + $0x40] sm:$0xf]
  %v36 = vld [vmem:[%s1 + $0x44] sm:$0xf]
  %v37 = vld [vmem:[%s1 + $0x48] sm:$0xf]
  %v38 = vld [vmem:[%s1 + $0x4c] sm:$0xf]
  %v39 = vld [vmem:[%s1 + $0x50] sm:$0xf]
  %v40 = vld [vmem:[%s1 + $0x54] sm:$0xf]
  %v41 = vld [vmem:[%s1 + $0x58] sm:$0xf]
  %v42 = vld [vmem:[%s1 + $0x5c] sm:$0xf]
  %v43 = vld [vmem:[%s1 + $0x60] sm:$0xf]
  %v44 = vld [vmem:[%s1 + $0x64] sm:$0xf]
  %v45 = vld [vmem:[%s1 + $0x68] sm:$0xf]
  %v46 = vld [vmem:[%s1 + $0x6c] sm:$0xf]
  %v47 = vld [vmem:[%s1 + $0x70] sm:$0xf]
  %v48 = vld [vmem:[%s1 + $0x74] sm:$0xf]
  %v49 = vld [vmem:[%s1 + $0x78] sm:$0xf]
  %v50 = vld [vmem:[%s1 + $0x7c] sm:$0xf]
  %v51 = vld [vmem:[%s2] sm:$0x1]
  %v53 = vlaneseq
  %v54 = vshrl.u32 %v53, 7
  %v55 = vsub.s32 0, %v54
  %v56 = vrot.slane %v51, %v55
  %v90 = vunpack.c.l.b16 %v19
  %v91 = vunpack.c.l.b16 %v20
  %v92 = vunpack.c.l.b16 %v21
  %v93 = vunpack.c.l.b16 %v22
  %v94 = vunpack.c.l.b16 %v23
  %v95 = vunpack.c.l.b16 %v24
  %v96 = vunpack.c.l.b16 %v25
  %v97 = vunpack.c.l.b16 %v26
  %v98 = vunpack.c.l.b16 %v27
  %v99 = vunpack.c.l.b16 %v28
  %v100 = vunpack.c.l.b16 %v29
  %v101 = vunpack.c.l.b16 %v30
  %v102 = vunpack.c.l.b16 %v31
  %v103 = vunpack.c.l.b16 %v32
  %v104 = vunpack.c.l.b16 %v33
  %v105 = vunpack.c.l.b16 %v34
  %v106 = vunpack.c.l.b16 %v35
  %v107 = vunpack.c.l.b16 %v36
  %v108 = vunpack.c.l.b16 %v37
  %v109 = vunpack.c.l.b16 %v38
  %v110 = vunpack.c.l.b16 %v39
  %v111 = vunpack.c.l.b16 %v40
  %v112 = vunpack.c.l.b16 %v41
  %v113 = vunpack.c.l.b16 %v42
  %v114 = vunpack.c.l.b16 %v43
  %v115 = vunpack.c.l.b16 %v44
  %v116 = vunpack.c.l.b16 %v45
  %v117 = vunpack.c.l.b16 %v46
  %v118 = vunpack.c.l.b16 %v47
  %v119 = vunpack.c.l.b16 %v48
  %v120 = vunpack.c.l.b16 %v49
  %v121 = vunpack.c.l.b16 %v50
  %v122 = vpack.c.b16 %v91, %v90
  %v123 = vpack.c.b16 %v93, %v92
  %v124 = vpack.c.b16 %v95, %v94
  %v125 = vpack.c.b16 %v97, %v96
  %v126 = vpack.c.b16 %v99, %v98
  %v127 = vpack.c.b16 %v101, %v100
  %v128 = vpack.c.b16 %v103, %v102
  %v129 = vpack.c.b16 %v105, %v104
  %v130 = vpack.c.b16 %v107, %v106
  %v131 = vpack.c.b16 %v109, %v108
  %v132 = vpack.c.b16 %v111, %v110
  %v133 = vpack.c.b16 %v113, %v112
  %v134 = vpack.c.b16 %v115, %v114
  %v135 = vpack.c.b16 %v117, %v116
  %v136 = vpack.c.b16 %v119, %v118
  %v137 = vpack.c.b16 %v121, %v120
  %154 = vmatprep.subr.bf16.mxu0 0
  %155 = vmatpush1.bf16.msra.mxu0 %v122
  %156 = vmatprep.subr.bf16.mxu0 0
  %157 = vmatpush1.bf16.msra.mxu0 %v123
  %158 = vmatprep.subr.bf16.mxu0 0
  %159 = vmatpush1.bf16.msra.mxu0 %v124
  %160 = vmatprep.subr.bf16.mxu0 0
  %161 = vmatpush1.bf16.msra.mxu0 %v125
  %162 = vmatprep.subr.bf16.mxu0 0
  %163 = vmatpush1.bf16.msra.mxu0 %v126
  %164 = vmatprep.subr.bf16.mxu0 0
  %165 = vmatpush1.bf16.msra.mxu0 %v127
  %166 = vmatprep.subr.bf16.mxu0 0
  %167 = vmatpush1.bf16.msra.mxu0 %v128
  %168 = vmatprep.subr.bf16.mxu0 0
  %169 = vmatpush1.bf16.msra.mxu0 %v129
  %170 = vmatprep.subr.bf16.mxu0 0
  %171 = vmatpush1.bf16.msra.mxu0 %v130
  %172 = vmatprep.subr.bf16.mxu0 0
  %173 = vmatpush1.bf16.msra.mxu0 %v131
  %174 = vmatprep.subr.bf16.mxu0 0
  %175 = vmatpush1.bf16.msra.mxu0 %v132
  %176 = vmatprep.subr.bf16.mxu0 0
  %177 = vmatpush1.bf16.msra.mxu0 %v133
  %178 = vmatprep.subr.bf16.mxu0 0
  %179 = vmatpush1.bf16.msra.mxu0 %v134
  %180 = vmatprep.subr.bf16.mxu0 0
  %181 = vmatpush1.bf16.msra.mxu0 %v135
  %182 = vmatprep.subr.bf16.mxu0 0
  %183 = vmatpush1.bf16.msra.mxu0 %v136
  %184 = vmatprep.subr.bf16.mxu0 0
  %185 = vmatpush1.bf16.msra.mxu0 %v137
  %186 = vmatprep.mubr.bf16.mxu0 %v18
  %187 = vmatmul.mubr.bf16.gmra.mrb[0].mxu0 %v17
  %v188 = vpop.f32.mrb[0].mxu0
  %v189 = vadd.f32 %v56, %v188
  %v190 = vpop.f32.mrb[0].mxu0
  %v191 = vpop.f32.mrb[0].mxu0
  %v192 = vpop.f32.mrb[0].mxu0
  %193 = vdwg.mxu0
  %194 = vst [vmem:[%s3] sm:$0xff] %v189
  // Predicated region
  $region14: #{lora_vit_forward.12} parent=0 // pred_check
    _
  $region15: #{lora_vit_forward.12} parent=0 // pred_check_branch
    %196 = sbr.rel (0) target = $region17
  $region16: #{lora_vit_forward.12} parent=0 // pred_region
    _
  $region17: #{lora_vit_forward.12} parent=0 // pred_fallthru
    _
  // Predicated region
  $region18: #{lora_vit_forward.12} parent=0 // pred_check
    _
  $region19: #{lora_vit_forward.12} parent=0 // pred_check_branch
    %198 = sbr.rel (0) target = $region21
  $region20: #{lora_vit_forward.12} parent=0 // pred_region
    _
  $region21: #{lora_vit_forward.12} parent=0 // pred_fallthru
    _

// kernel: lora_vit_forward.17
$region0: #{lora_vit_forward.17}
  #allocation0 [shape = 'u32[]', space=smem, size = 0x4, offset = 0x4, fixed_abs, tag = 'smem constant byte address 0x4 - core index']
  #allocation1 [shape = 'u32[144,128]{1,0:T(1,128)}', space=vmem, size = 0x12000, scoped, tag = 'internal scratch']
  %s0 = inlined_call_operand.vmem [shape: bf16[16,256], index: 0, kind: input, shape index: {}]
  %s1 = inlined_call_operand.vmem [shape: bf16[256,128], index: 1, kind: input, shape index: {}]
  %s2 = inlined_call_operand.vmem [shape: f32[1,128], index: 2, kind: input, shape index: {}]
  %s3 = inlined_call_operand.vmem [shape: f32[16,128], index: 3, kind: input, shape index: {}]
  %s4 = inlined_call_operand.vmem [shape: f32[16,128], index: 4, kind: output, shape index: {}]
  %s5 = sld [smem:[#allocation0]]
  $region26: #{lora_vit_forward.17} parent=0
    _
  %s7 = ssub.s32 1, %s5
  %s8 = scalar_select 0, %s7, %s5
  // Predicated region
  $region2: #{lora_vit_forward.17} parent=0 // pred_check
    _
  $region3: #{lora_vit_forward.17} parent=0 // pred_check_branch
    %10 = sbr.rel (0) target = $region5
  $region4: #{lora_vit_forward.17} parent=0 // pred_region
    _
  $region5: #{lora_vit_forward.17} parent=0 // pred_fallthru
    _
  // Predicated region
  $region6: #{lora_vit_forward.17} parent=0 // pred_check
    _
  $region7: #{lora_vit_forward.17} parent=0 // pred_check_branch
    %12 = sbr.rel (0) target = $region9
  $region8: #{lora_vit_forward.17} parent=0 // pred_region
    _
  $region9: #{lora_vit_forward.17} parent=0 // pred_fallthru
    _
  // Predicated region
  $region10: #{lora_vit_forward.17} parent=0 // pred_check
    _
  $region11: #{lora_vit_forward.17} parent=0 // pred_check_branch
    %14 = sbr.rel (0) target = $region13
  $region12: #{lora_vit_forward.17} parent=0 // pred_region
    _
  $region13: #{lora_vit_forward.17} parent=0 // pred_fallthru
    _
  // Predicated region
  $region14: #{lora_vit_forward.17} parent=0 // pred_check
    _
  $region15: #{lora_vit_forward.17} parent=0 // pred_check_branch
    %16 = sbr.rel (0) target = $region17
  $region16: #{lora_vit_forward.17} parent=0 // pred_region
    _
  $region17: #{lora_vit_forward.17} parent=0 // pred_fallthru
    _
  %v18 = vld [vmem:[%s0] sm:$0xff]
  %v19 = vld [vmem:[%s0 + $0x8] sm:$0xff]
  %v20 = vld [vmem:[%s1] sm:$0xf]
  %v21 = vld [vmem:[%s1 + $0x4] sm:$0xf]
  %v22 = vld [vmem:[%s1 + $0x8] sm:$0xf]
  %v23 = vld [vmem:[%s1 + $0xc] sm:$0xf]
  %v24 = vld [vmem:[%s1 + $0x10] sm:$0xf]
  %v25 = vld [vmem:[%s1 + $0x14] sm:$0xf]
  %v26 = vld [vmem:[%s1 + $0x18] sm:$0xf]
  %v27 = vld [vmem:[%s1 + $0x1c] sm:$0xf]
  %v28 = vld [vmem:[%s1 + $0x20] sm:$0xf]
  %v29 = vld [vmem:[%s1 + $0x24] sm:$0xf]
  %v30 = vld [vmem:[%s1 + $0x28] sm:$0xf]
  %v31 = vld [vmem:[%s1 + $0x2c] sm:$0xf]
  %v32 = vld [vmem:[%s1 + $0x30] sm:$0xf]
  %v33 = vld [vmem:[%s1 + $0x34] sm:$0xf]
  %v34 = vld [vmem:[%s1 + $0x38] sm:$0xf]
  %v35 = vld [vmem:[%s1 + $0x3c] sm:$0xf]
  %v36 = vld [vmem:[%s1 + $0x40] sm:$0xf]
  %v37 = vld [vmem:[%s1 + $0x44] sm:$0xf]
  %v38 = vld [vmem:[%s1 + $0x48] sm:$0xf]
  %v39 = vld [vmem:[%s1 + $0x4c] sm:$0xf]
  %v40 = vld [vmem:[%s1 + $0x50] sm:$0xf]
  %v41 = vld [vmem:[%s1 + $0x54] sm:$0xf]
  %v42 = vld [vmem:[%s1 + $0x58] sm:$0xf]
  %v43 = vld [vmem:[%s1 + $0x5c] sm:$0xf]
  %v44 = vld [vmem:[%s1 + $0x60] sm:$0xf]
  %v45 = vld [vmem:[%s1 + $0x64] sm:$0xf]
  %v46 = vld [vmem:[%s1 + $0x68] sm:$0xf]
  %v47 = vld [vmem:[%s1 + $0x6c] sm:$0xf]
  %v48 = vld [vmem:[%s1 + $0x70] sm:$0xf]
  %v49 = vld [vmem:[%s1 + $0x74] sm:$0xf]
  %v50 = vld [vmem:[%s1 + $0x78] sm:$0xf]
  %v51 = vld [vmem:[%s1 + $0x7c] sm:$0xf]
  %v52 = vld [vmem:[%s2] sm:$0x1]
  %v54 = vlaneseq
  %v55 = vshrl.u32 %v54, 7
  %v56 = vsub.s32 0, %v55
  %v57 = vrot.slane %v52, %v56
  %v61 = vunpack.c.l.b16 %v18
  %v62 = vunpack.c.h.b16 %v18
  %v63 = vunpack.c.l.b16 %v19
  %v64 = vunpack.c.h.b16 %v19
  %v65 = vpack.c.b16 %v63, %v61
  %v66 = vpack.c.b16 %v64, %v62
  %v101 = vunpack.c.l.b16 %v20
  %v102 = vunpack.c.l.b16 %v21
  %v103 = vunpack.c.l.b16 %v22
  %v104 = vunpack.c.l.b16 %v23
  %v105 = vunpack.c.l.b16 %v24
  %v106 = vunpack.c.l.b16 %v25
  %v107 = vunpack.c.l.b16 %v26
  %v108 = vunpack.c.l.b16 %v27
  %v109 = vunpack.c.l.b16 %v28
  %v110 = vunpack.c.l.b16 %v29
  %v111 = vunpack.c.l.b16 %v30
  %v112 = vunpack.c.l.b16 %v31
  %v113 = vunpack.c.l.b16 %v32
  %v114 = vunpack.c.l.b16 %v33
  %v115 = vunpack.c.l.b16 %v34
  %v116 = vunpack.c.l.b16 %v35
  %v117 = vunpack.c.l.b16 %v36
  %v118 = vunpack.c.l.b16 %v37
  %v119 = vunpack.c.l.b16 %v38
  %v120 = vunpack.c.l.b16 %v39
  %v121 = vunpack.c.l.b16 %v40
  %v122 = vunpack.c.l.b16 %v41
  %v123 = vunpack.c.l.b16 %v42
  %v124 = vunpack.c.l.b16 %v43
  %v125 = vunpack.c.l.b16 %v44
  %v126 = vunpack.c.l.b16 %v45
  %v127 = vunpack.c.l.b16 %v46
  %v128 = vunpack.c.l.b16 %v47
  %v129 = vunpack.c.l.b16 %v48
  %v130 = vunpack.c.l.b16 %v49
  %v131 = vunpack.c.l.b16 %v50
  %v132 = vunpack.c.l.b16 %v51
  %v133 = vpack.c.b16 %v102, %v101
  %v134 = vpack.c.b16 %v104, %v103
  %v135 = vpack.c.b16 %v106, %v105
  %v136 = vpack.c.b16 %v108, %v107
  %v137 = vpack.c.b16 %v110, %v109
  %v138 = vpack.c.b16 %v112, %v111
  %v139 = vpack.c.b16 %v114, %v113
  %v140 = vpack.c.b16 %v116, %v115
  %v141 = vpack.c.b16 %v118, %v117
  %v142 = vpack.c.b16 %v120, %v119
  %v143 = vpack.c.b16 %v122, %v121
  %v144 = vpack.c.b16 %v124, %v123
  %v145 = vpack.c.b16 %v126, %v125
  %v146 = vpack.c.b16 %v128, %v127
  %v147 = vpack.c.b16 %v130, %v129
  %v148 = vpack.c.b16 %v132, %v131
  %165 = vmatprep.subr.bf16.mxu0 0
  %166 = vmatpush1.bf16.msra.mxu0 %v133
  %167 = vmatprep.subr.bf16.mxu0 0
  %168 = vmatpush1.bf16.msra.mxu0 %v134
  %169 = vmatprep.subr.bf16.mxu0 0
  %170 = vmatpush1.bf16.msra.mxu0 %v135
  %171 = vmatprep.subr.bf16.mxu0 0
  %172 = vmatpush1.bf16.msra.mxu0 %v136
  %173 = vmatprep.subr.bf16.mxu0 0
  %174 = vmatpush1.bf16.msra.mxu0 %v137
  %175 = vmatprep.subr.bf16.mxu0 0
  %176 = vmatpush1.bf16.msra.mxu0 %v138
  %177 = vmatprep.subr.bf16.mxu0 0
  %178 = vmatpush1.bf16.msra.mxu0 %v139
  %179 = vmatprep.subr.bf16.mxu0 0
  %180 = vmatpush1.bf16.msra.mxu0 %v140
  %181 = vmatprep.subr.bf16.mxu0 0
  %182 = vmatpush1.bf16.msra.mxu0 %v141
  %183 = vmatprep.subr.bf16.mxu0 0
  %184 = vmatpush1.bf16.msra.mxu0 %v142
  %185 = vmatprep.subr.bf16.mxu0 0
  %186 = vmatpush1.bf16.msra.mxu0 %v143
  %187 = vmatprep.subr.bf16.mxu0 0
  %188 = vmatpush1.bf16.msra.mxu0 %v144
  %189 = vmatprep.subr.bf16.mxu0 0
  %190 = vmatpush1.bf16.msra.mxu0 %v145
  %191 = vmatprep.subr.bf16.mxu0 0
  %192 = vmatpush1.bf16.msra.mxu0 %v146
  %193 = vmatprep.subr.bf16.mxu0 0
  %194 = vmatpush1.bf16.msra.mxu0 %v147
  %195 = vmatprep.subr.bf16.mxu0 0
  %196 = vmatpush1.bf16.msra.mxu0 %v148
  %197 = vmatprep.mubr.bf16.mxu0 %v66
  %198 = vmatmul.mubr.bf16.gmra.mrb[0].mxu0 %v65
  %v199 = vpop.f32.mrb[0].mxu0
  %v200 = vadd.f32 %v57, %v199
  %v201 = vpop.f32.mrb[0].mxu0
  %v202 = vpop.f32.mrb[0].mxu0
  %v203 = vadd.f32 %v57, %v202
  %v204 = vpop.f32.mrb[0].mxu0
  %205 = vdwg.mxu0
  %v206 = vld [vmem:[%s3] sm:$0xff]
  %v207 = vld [vmem:[%s3 + $0x8] sm:$0xff]
  %v208 = vadd.f32 %v200, %v206
  %v209 = vadd.f32 %v203, %v207
  %210 = vst [vmem:[%s4] sm:$0xff] %v208
  %211 = vst [vmem:[%s4 + $0x8] sm:$0xff] %v209
  // Predicated region
  $region18: #{lora_vit_forward.17} parent=0 // pred_check
    _
  $region19: #{lora_vit_forward.17} parent=0 // pred_check_branch
    %213 = sbr.rel (0) target = $region21
  $region20: #{lora_vit_forward.17} parent=0 // pred_region
    _
  $region21: #{lora_vit_forward.17} parent=0 // pred_fallthru
    _
  // Predicated region
  $region22: #{lora_vit_forward.17} parent=0 // pred_check
    _
  $region23: #{lora_vit_forward.17} parent=0 // pred_check_branch
    %215 = sbr.rel (0) target = $region25
  $region24: #{lora_vit_forward.17} parent=0 // pred_region
    _
  $region25: #{lora_vit_forward.17} parent=0 // pred_fallthru
    _

// kernel: lora_vit_forward.16
$region0: #{lora_vit_forward.16}
  #allocation0 [shape = 'u32[]', space=smem, size = 0x4, offset = 0x4, fixed_abs, tag = 'smem constant byte address 0x4 - core index']
  #allocation1 [shape = 'u32[144,128]{1,0:T(1,128)}', space=vmem, size = 0x12000, scoped, tag = 'internal scratch']
  %s0 = inlined_call_operand.vmem [shape: f32[16,128], index: 0, kind: input, shape index: {}]
  %s1 = inlined_call_operand.vmem [shape: f32[1,128], index: 1, kind: input, shape index: {}]
  %s2 = inlined_call_operand.vmem [shape: f32[1,128], index: 2, kind: input, shape index: {}]
  %s3 = inlined_call_operand.vmem [shape: bf16[128,256], index: 3, kind: input, shape index: {}]
  %s4 = inlined_call_operand.vmem [shape: f32[1,256], index: 4, kind: input, shape index: {}]
  %s5 = inlined_call_operand.vmem [shape: bf16[16,256], index: 5, kind: output, shape index: {}]
  %s6 = sld [smem:[#allocation0]]
  $region30: #{lora_vit_forward.16} parent=0
    _
  %s8 = ssub.s32 1, %s6
  %s9 = scalar_select 0, %s8, %s6
  // Predicated region
  $region2: #{lora_vit_forward.16} parent=0 // pred_check
    _
  $region3: #{lora_vit_forward.16} parent=0 // pred_check_branch
    %11 = sbr.rel (0) target = $region5
  $region4: #{lora_vit_forward.16} parent=0 // pred_region
    _
  $region5: #{lora_vit_forward.16} parent=0 // pred_fallthru
    _
  // Predicated region
  $region6: #{lora_vit_forward.16} parent=0 // pred_check
    _
  $region7: #{lora_vit_forward.16} parent=0 // pred_check_branch
    %13 = sbr.rel (0) target = $region9
  $region8: #{lora_vit_forward.16} parent=0 // pred_region
    _
  $region9: #{lora_vit_forward.16} parent=0 // pred_fallthru
    _
  // Predicated region
  $region10: #{lora_vit_forward.16} parent=0 // pred_check
    _
  $region11: #{lora_vit_forward.16} parent=0 // pred_check_branch
    %15 = sbr.rel (0) target = $region13
  $region12: #{lora_vit_forward.16} parent=0 // pred_region
    _
  $region13: #{lora_vit_forward.16} parent=0 // pred_fallthru
    _
  // Predicated region
  $region14: #{lora_vit_forward.16} parent=0 // pred_check
    _
  $region15: #{lora_vit_forward.16} parent=0 // pred_check_branch
    %17 = sbr.rel (0) target = $region17
  $region16: #{lora_vit_forward.16} parent=0 // pred_region
    _
  $region17: #{lora_vit_forward.16} parent=0 // pred_fallthru
    _
  // Predicated region
  $region18: #{lora_vit_forward.16} parent=0 // pred_check
    _
  $region19: #{lora_vit_forward.16} parent=0 // pred_check_branch
    %19 = sbr.rel (0) target = $region21
  $region20: #{lora_vit_forward.16} parent=0 // pred_region
    _
  $region21: #{lora_vit_forward.16} parent=0 // pred_fallthru
    _
  %v21 = vld [vmem:[%s0] sm:$0xff]
  %v22 = vld [vmem:[%s0 + $0x8] sm:$0xff]
  %23 = vadd.xlane.f32.xlu0 %v21
  %v24 = vpop.xlane.xlu0 %23
  %25 = vadd.xlane.f32.xlu0 %v22
  %v26 = vpop.xlane.xlu0 %25
  %v27 = vmul.f32 %v24, 0.0078125
  %v28 = vmul.f32 %v26, 0.0078125
  %v29 = vmul.f32 %v21, %v21
  %v30 = vmul.f32 %v22, %v22
  %31 = vadd.xlane.f32.xlu0 %v29
  %v32 = vpop.xlane.xlu0 %31
  %33 = vadd.xlane.f32.xlu0 %v30
  %v34 = vpop.xlane.xlu0 %33
  %v35 = vmul.f32 %v32, 0.0078125
  %v36 = vmul.f32 %v34, 0.0078125
  %v37 = vmul.f32 %v27, %v27
  %v38 = vmul.f32 %v28, %v28
  %v39 = vsub.f32 %v35, %v37
  %v40 = vsub.f32 %v36, %v38
  %v41 = vsub.f32 %v21, %v27
  %v42 = vsub.f32 %v22, %v28
  %v43 = vadd.f32 %v39, 1e-06
  %v44 = vadd.f32 %v40, 1e-06
  %v45 = vrsqrt.pop %v43
  %v46 = vrsqrt.pop %v44
  %v47 = vmul.f32 %v41, %v45
  %v48 = vmul.f32 %v42, %v46
  %v49 = vld [vmem:[%s1] sm:$0x1]
  %v51 = vlaneseq
  %v52 = vshrl.u32 %v51, 7
  %v53 = vsub.s32 0, %v52
  %v54 = vrot.slane %v49, %v53
  %v56 = vmul.f32 %v47, %v54
  %v57 = vmul.f32 %v48, %v54
  %v58 = vld [vmem:[%s2] sm:$0x1]
  %v60 = vlaneseq
  %v61 = vshrl.u32 %v60, 7
  %v62 = vsub.s32 0, %v61
  %v63 = vrot.slane %v58, %v62
  %v65 = vadd.f32 %v56, %v63
  %v66 = vadd.f32 %v57, %v63
  %v67 = vpack.c.bf16 %v66, %v65
  %v68 = vld [vmem:[%s3] sm:$0xff]
  %v69 = vld [vmem:[%s3 + $0x8] sm:$0xff]
  %v70 = vld [vmem:[%s3 + $0x10] sm:$0xff]
  %v71 = vld [vmem:[%s3 + $0x18] sm:$0xff]
  %v72 = vld [vmem:[%s3 + $0x20] sm:$0xff]
  %v73 = vld [vmem:[%s3 + $0x28] sm:$0xff]
  %v74 = vld [vmem:[%s3 + $0x30] sm:$0xff]
  %v75 = vld [vmem:[%s3 + $0x38] sm:$0xff]
  %v76 = vld [vmem:[%s3 + $0x40] sm:$0xff]
  %v77 = vld [vmem:[%s3 + $0x48] sm:$0xff]
  %v78 = vld [vmem:[%s3 + $0x50] sm:$0xff]
  %v79 = vld [vmem:[%s3 + $0x58] sm:$0xff]
  %v80 = vld [vmem:[%s3 + $0x60] sm:$0xff]
  %v81 = vld [vmem:[%s3 + $0x68] sm:$0xff]
  %v82 = vld [vmem:[%s3 + $0x70] sm:$0xff]
  %v83 = vld [vmem:[%s3 + $0x78] sm:$0xff]
  %v84 = vld [vmem:[%s4] sm:$0x3]
  %v86 = vlaneseq
  %v87 = vshrl.u32 %v86, 7
  %v88 = vsub.s32 0, %v87
  %v89 = vrot.slane %v84, %v88
  %v90 = vlaneseq
  %v91 = vshrl.u32 %v90, 7
  %v92 = vsub.s32 1, %v91
  %v93 = vrot.slane %v84, %v92
  %v112 = vunpack.c.l.b16 %v68
  %v113 = vunpack.c.h.b16 %v68
  %v114 = vunpack.c.l.b16 %v69
  %v115 = vunpack.c.h.b16 %v69
  %v116 = vunpack.c.l.b16 %v70
  %v117 = vunpack.c.h.b16 %v70
  %v118 = vunpack.c.l.b16 %v71
  %v119 = vunpack.c.h.b16 %v71
  %v120 = vunpack.c.l.b16 %v72
  %v121 = vunpack.c.h.b16 %v72
  %v122 = vunpack.c.l.b16 %v73
  %v123 = vunpack.c.h.b16 %v73
  %v124 = vunpack.c.l.b16 %v74
  %v125 = vunpack.c.h.b16 %v74
  %v126 = vunpack.c.l.b16 %v75
  %v127 = vunpack.c.h.b16 %v75
  %v128 = vunpack.c.l.b16 %v76
  %v129 = vunpack.c.h.b16 %v76
  %v130 = vunpack.c.l.b16 %v77
  %v131 = vunpack.c.h.b16 %v77
  %v132 = vunpack.c.l.b16 %v78
  %v133 = vunpack.c.h.b16 %v78
  %v134 = vunpack.c.l.b16 %v79
  %v135 = vunpack.c.h.b16 %v79
  %v136 = vunpack.c.l.b16 %v80
  %v137 = vunpack.c.h.b16 %v80
  %v138 = vunpack.c.l.b16 %v81
  %v139 = vunpack.c.h.b16 %v81
  %v140 = vunpack.c.l.b16 %v82
  %v141 = vunpack.c.h.b16 %v82
  %v142 = vunpack.c.l.b16 %v83
  %v143 = vunpack.c.h.b16 %v83
  %v144 = vpack.c.b16 %v114, %v112
  %v145 = vpack.c.b16 %v115, %v113
  %v146 = vpack.c.b16 %v118, %v116
  %v147 = vpack.c.b16 %v119, %v117
  %v148 = vpack.c.b16 %v122, %v120
  %v149 = vpack.c.b16 %v123, %v121
  %v150 = vpack.c.b16 %v126, %v124
  %v151 = vpack.c.b16 %v127, %v125
  %v152 = vpack.c.b16 %v130, %v128
  %v153 = vpack.c.b16 %v131, %v129
  %v154 = vpack.c.b16 %v134, %v132
  %v155 = vpack.c.b16 %v135, %v133
  %v156 = vpack.c.b16 %v138, %v136
  %v157 = vpack.c.b16 %v139, %v137
  %v158 = vpack.c.b16 %v142, %v140
  %v159 = vpack.c.b16 %v143, %v141
  %176 = vmatprep.subr.bf16.mxu0 %v145
  %177 = vmatpush1.bf16.msra.mxu0 %v144
  %178 = vmatprep.subr.bf16.mxu0 %v147
  %179 = vmatpush1.bf16.msra.mxu0 %v146
  %180 = vmatprep.subr.bf16.mxu0 %v149
  %181 = vmatpush1.bf16.msra.mxu0 %v148
  %182 = vmatprep.subr.bf16.mxu0 %v151
  %183 = vmatpush1.bf16.msra.mxu0 %v150
  %184 = vmatprep.subr.bf16.mxu0 %v153
  %185 = vmatpush1.bf16.msra.mxu0 %v152
  %186 = vmatprep.subr.bf16.mxu0 %v155
  %187 = vmatpush1.bf16.msra.mxu0 %v154
  %188 = vmatprep.subr.bf16.mxu0 %v157
  %189 = vmatpush1.bf16.msra.mxu0 %v156
  %190 = vmatprep.subr.bf16.mxu0 %v159
  %191 = vmatpush1.bf16.msra.mxu0 %v158
  %192 = vmatprep.subr.bf16.mxu0 0
  %193 = vmatpush1.bf16.msra.mxu0 0
  %194 = vmatprep.subr.bf16.mxu0 0
  %195 = vmatpush1.bf16.msra.mxu0 0
  %196 = vmatprep.subr.bf16.mxu0 0
  %197 = vmatpush1.bf16.msra.mxu0 0
  %198 = vmatprep.subr.bf16.mxu0 0
  %199 = vmatpush1.bf16.msra.mxu0 0
  %200 = vmatprep.subr.bf16.mxu0 0
  %201 = vmatpush1.bf16.msra.mxu0 0
  %202 = vmatprep.subr.bf16.mxu0 0
  %203 = vmatpush1.bf16.msra.mxu0 0
  %204 = vmatprep.subr.bf16.mxu0 0
  %205 = vmatpush1.bf16.msra.mxu0 0
  %206 = vmatprep.subr.bf16.mxu0 0
  %207 = vmatpush1.bf16.msra.mxu0 0
  %208 = vmatprep.mubr.bf16.mxu0 0
  %209 = vmatmul.mubr.bf16.gmra.mrb[0].mxu0 %v67
  %v210 = vpop.f32.mrb[0].mxu0
  %v211 = vadd.f32 %v89, %v210
  %v212 = vpop.f32.mrb[0].mxu0
  %v213 = vadd.f32 %v93, %v212
  %v214 = vpop.f32.mrb[0].mxu0
  %v215 = vadd.f32 %v89, %v214
  %v216 = vpop.f32.mrb[0].mxu0
  %v217 = vadd.f32 %v93, %v216
  %218 = vdwg.mxu0
  %v219 = vmul.f32 %v211, %v211
  %v220 = vmul.f32 %v213, %v213
  %v221 = vmul.f32 %v215, %v215
  %v222 = vmul.f32 %v217, %v217
  %v223 = vmul.f32 %v211, %v219
  %v224 = vmul.f32 %v213, %v220
  %v225 = vmul.f32 %v215, %v221
  %v226 = vmul.f32 %v217, %v222
  %v227 = vmul.f32 %v223, 0.044715
  %v228 = vmul.f32 %v224, 0.044715
  %v229 = vmul.f32 %v225, 0.044715
  %v230 = vmul.f32 %v226, 0.044715
  %v231 = vadd.f32 %v211, %v227
  %v232 = vadd.f32 %v213, %v228
  %v233 = vadd.f32 %v215, %v229
  %v234 = vadd.f32 %v217, %v230
  %v235 = vmul.f32 %v231, 0.7978846
  %v236 = vmul.f32 %v232, 0.7978846
  %v237 = vmul.f32 %v233, 0.7978846
  %v238 = vmul.f32 %v234, 0.7978846
  %v239 = vtanh.pop %v235
  %v240 = vtanh.pop %v236
  %v241 = vtanh.pop %v237
  %v242 = vtanh.pop %v238
  %v243 = vadd.f32 %v239, 1.0
  %v244 = vadd.f32 %v240, 1.0
  %v245 = vadd.f32 %v241, 1.0
  %v246 = vadd.f32 %v242, 1.0
  %v247 = vmul.f32 %v243, 0.5
  %v248 = vmul.f32 %v244, 0.5
  %v249 = vmul.f32 %v245, 0.5
  %v250 = vmul.f32 %v246, 0.5
  %v251 = vmul.f32 %v211, %v247
  %v252 = vmul.f32 %v213, %v248
  %v253 = vmul.f32 %v215, %v249
  %v254 = vmul.f32 %v217, %v250
  %v255 = vpack.c.bf16 %v253, %v251
  %v256 = vpack.c.bf16 %v254, %v252
  %v259 = vunpack.c.l.b16 %v255
  %v260 = vunpack.c.l.b16 %v256
  %v261 = vunpack.c.h.b16 %v255
  %v262 = vunpack.c.h.b16 %v256
  %v263 = vpack.c.b16 %v260, %v259
  %v264 = vpack.c.b16 %v262, %v261
  %267 = vst [vmem:[%s5] sm:$0xff] %v263
  %268 = vst [vmem:[%s5 + $0x8] sm:$0xff] %v264
  // Predicated region
  $region22: #{lora_vit_forward.16} parent=0 // pred_check
    _
  $region23: #{lora_vit_forward.16} parent=0 // pred_check_branch
    %270 = sbr.rel (0) target = $region25
  $region24: #{lora_vit_forward.16} parent=0 // pred_region
    _
  $region25: #{lora_vit_forward.16} parent=0 // pred_fallthru
    _
  // Predicated region
  $region26: #{lora_vit_forward.16} parent=0 // pred_check
    _
  $region27: #{lora_vit_forward.16} parent=0 // pred_check_branch
    %272 = sbr.rel (0) target = $region29
  $region28: #{lora_vit_forward.16} parent=0 // pred_region
    _
  $region29: #{lora_vit_forward.16} parent=0 // pred_fallthru
    _

// kernel: lora_vit_forward.23
$region0: #{lora_vit_forward.23}
  #allocation0 [shape = 'u32[]', space=smem, size = 0x4, offset = 0x4, fixed_abs, tag = 'smem constant byte address 0x4 - core index']
  #allocation1 [shape = 'u32[144,128]{1,0:T(1,128)}', space=vmem, size = 0x12000, scoped, tag = 'internal scratch']
  %s0 = inlined_call_operand.vmem [shape: f32[8,128], index: 0, kind: input, shape index: {}]
  %s1 = inlined_call_operand.vmem [shape: f32[1,128], index: 1, kind: input, shape index: {}]
  %s2 = inlined_call_operand.vmem [shape: f32[1,128], index: 2, kind: input, shape index: {}]
  %s3 = inlined_call_operand.vmem [shape: bf16[128,128], index: 3, kind: input, shape index: {}]
  %s4 = inlined_call_operand.vmem [shape: f32[1,128], index: 4, kind: input, shape index: {}]
  %s5 = inlined_call_operand.vmem [shape: f32[8,128], index: 5, kind: output, shape index: {}]
  %s6 = sld [smem:[#allocation0]]
  $region30: #{lora_vit_forward.23} parent=0
    _
  %s8 = ssub.s32 1, %s6
  %s9 = scalar_select 0, %s8, %s6
  // Predicated region
  $region2: #{lora_vit_forward.23} parent=0 // pred_check
    _
  $region3: #{lora_vit_forward.23} parent=0 // pred_check_branch
    %11 = sbr.rel (0) target = $region5
  $region4: #{lora_vit_forward.23} parent=0 // pred_region
    _
  $region5: #{lora_vit_forward.23} parent=0 // pred_fallthru
    _
  // Predicated region
  $region6: #{lora_vit_forward.23} parent=0 // pred_check
    _
  $region7: #{lora_vit_forward.23} parent=0 // pred_check_branch
    %13 = sbr.rel (0) target = $region9
  $region8: #{lora_vit_forward.23} parent=0 // pred_region
    _
  $region9: #{lora_vit_forward.23} parent=0 // pred_fallthru
    _
  // Predicated region
  $region10: #{lora_vit_forward.23} parent=0 // pred_check
    _
  $region11: #{lora_vit_forward.23} parent=0 // pred_check_branch
    %15 = sbr.rel (0) target = $region13
  $region12: #{lora_vit_forward.23} parent=0 // pred_region
    _
  $region13: #{lora_vit_forward.23} parent=0 // pred_fallthru
    _
  // Predicated region
  $region14: #{lora_vit_forward.23} parent=0 // pred_check
    _
  $region15: #{lora_vit_forward.23} parent=0 // pred_check_branch
    %17 = sbr.rel (0) target = $region17
  $region16: #{lora_vit_forward.23} parent=0 // pred_region
    _
  $region17: #{lora_vit_forward.23} parent=0 // pred_fallthru
    _
  // Predicated region
  $region18: #{lora_vit_forward.23} parent=0 // pred_check
    _
  $region19: #{lora_vit_forward.23} parent=0 // pred_check_branch
    %19 = sbr.rel (0) target = $region21
  $region20: #{lora_vit_forward.23} parent=0 // pred_region
    _
  $region21: #{lora_vit_forward.23} parent=0 // pred_fallthru
    _
  %v21 = vld [vmem:[%s0] sm:$0xff]
  %22 = vadd.xlane.f32.xlu0 %v21
  %v23 = vpop.xlane.xlu0 %22
  %v24 = vmul.f32 %v23, 0.0078125
  %v25 = vmul.f32 %v21, %v21
  %26 = vadd.xlane.f32.xlu0 %v25
  %v27 = vpop.xlane.xlu0 %26
  %v28 = vmul.f32 %v27, 0.0078125
  %v29 = vmul.f32 %v24, %v24
  %v30 = vsub.f32 %v28, %v29
  %v31 = vsub.f32 %v21, %v24
  %v32 = vadd.f32 %v30, 1e-06
  %v33 = vrsqrt.pop %v32
  %v34 = vmul.f32 %v31, %v33
  %v35 = vld [vmem:[%s1] sm:$0x1]
  %v37 = vlaneseq
  %v38 = vshrl.u32 %v37, 7
  %v39 = vsub.s32 0, %v38
  %v40 = vrot.slane %v35, %v39
  %v42 = vmul.f32 %v34, %v40
  %v43 = vld [vmem:[%s2] sm:$0x1]
  %v45 = vlaneseq
  %v46 = vshrl.u32 %v45, 7
  %v47 = vsub.s32 0, %v46
  %v48 = vrot.slane %v43, %v47
  %v50 = vadd.f32 %v42, %v48
  %v51 = vpack.c.bf16 %v50, %v50
  %v52 = vld [vmem:[%s3] sm:$0xf]
  %v53 = vld [vmem:[%s3 + $0x4] sm:$0xf]
  %v54 = vld [vmem:[%s3 + $0x8] sm:$0xf]
  %v55 = vld [vmem:[%s3 + $0xc] sm:$0xf]
  %v56 = vld [vmem:[%s3 + $0x10] sm:$0xf]
  %v57 = vld [vmem:[%s3 + $0x14] sm:$0xf]
  %v58 = vld [vmem:[%s3 + $0x18] sm:$0xf]
  %v59 = vld [vmem:[%s3 + $0x1c] sm:$0xf]
  %v60 = vld [vmem:[%s3 + $0x20] sm:$0xf]
  %v61 = vld [vmem:[%s3 + $0x24] sm:$0xf]
  %v62 = vld [vmem:[%s3 + $0x28] sm:$0xf]
  %v63 = vld [vmem:[%s3 + $0x2c] sm:$0xf]
  %v64 = vld [vmem:[%s3 + $0x30] sm:$0xf]
  %v65 = vld [vmem:[%s3 + $0x34] sm:$0xf]
  %v66 = vld [vmem:[%s3 + $0x38] sm:$0xf]
  %v67 = vld [vmem:[%s3 + $0x3c] sm:$0xf]
  %v68 = vld [vmem:[%s4] sm:$0x1]
  %v70 = vlaneseq
  %v71 = vshrl.u32 %v70, 7
  %v72 = vsub.s32 0, %v71
  %v73 = vrot.slane %v68, %v72
  %v91 = vunpack.c.l.b16 %v52
  %v92 = vunpack.c.l.b16 %v53
  %v93 = vunpack.c.l.b16 %v54
  %v94 = vunpack.c.l.b16 %v55
  %v95 = vunpack.c.l.b16 %v56
  %v96 = vunpack.c.l.b16 %v57
  %v97 = vunpack.c.l.b16 %v58
  %v98 = vunpack.c.l.b16 %v59
  %v99 = vunpack.c.l.b16 %v60
  %v100 = vunpack.c.l.b16 %v61
  %v101 = vunpack.c.l.b16 %v62
  %v102 = vunpack.c.l.b16 %v63
  %v103 = vunpack.c.l.b16 %v64
  %v104 = vunpack.c.l.b16 %v65
  %v105 = vunpack.c.l.b16 %v66
  %v106 = vunpack.c.l.b16 %v67
  %v107 = vpack.c.b16 %v92, %v91
  %v108 = vpack.c.b16 %v94, %v93
  %v109 = vpack.c.b16 %v96, %v95
  %v110 = vpack.c.b16 %v98, %v97
  %v111 = vpack.c.b16 %v100, %v99
  %v112 = vpack.c.b16 %v102, %v101
  %v113 = vpack.c.b16 %v104, %v103
  %v114 = vpack.c.b16 %v106, %v105
  %123 = vmatprep.subr.bf16.mxu0 0
  %124 = vmatpush1.bf16.msra.mxu0 %v107
  %125 = vmatprep.subr.bf16.mxu0 0
  %126 = vmatpush1.bf16.msra.mxu0 %v108
  %127 = vmatprep.subr.bf16.mxu0 0
  %128 = vmatpush1.bf16.msra.mxu0 %v109
  %129 = vmatprep.subr.bf16.mxu0 0
  %130 = vmatpush1.bf16.msra.mxu0 %v110
  %131 = vmatprep.subr.bf16.mxu0 0
  %132 = vmatpush1.bf16.msra.mxu0 %v111
  %133 = vmatprep.subr.bf16.mxu0 0
  %134 = vmatpush1.bf16.msra.mxu0 %v112
  %135 = vmatprep.subr.bf16.mxu0 0
  %136 = vmatpush1.bf16.msra.mxu0 %v113
  %137 = vmatprep.subr.bf16.mxu0 0
  %138 = vmatpush1.bf16.msra.mxu0 %v114
  %139 = vmatprep.subr.bf16.mxu0 0
  %140 = vmatpush1.bf16.msra.mxu0 0
  %141 = vmatprep.subr.bf16.mxu0 0
  %142 = vmatpush1.bf16.msra.mxu0 0
  %143 = vmatprep.subr.bf16.mxu0 0
  %144 = vmatpush1.bf16.msra.mxu0 0
  %145 = vmatprep.subr.bf16.mxu0 0
  %146 = vmatpush1.bf16.msra.mxu0 0
  %147 = vmatprep.subr.bf16.mxu0 0
  %148 = vmatpush1.bf16.msra.mxu0 0
  %149 = vmatprep.subr.bf16.mxu0 0
  %150 = vmatpush1.bf16.msra.mxu0 0
  %151 = vmatprep.subr.bf16.mxu0 0
  %152 = vmatpush1.bf16.msra.mxu0 0
  %153 = vmatprep.subr.bf16.mxu0 0
  %154 = vmatpush1.bf16.msra.mxu0 0
  %155 = vmatprep.mubr.bf16.mxu0 0
  %156 = vmatmul.mubr.bf16.gmra.mrb[0].mxu0 %v51
  %v157 = vpop.f32.mrb[0].mxu0
  %v158 = vadd.f32 %v73, %v157
  %v159 = vpop.f32.mrb[0].mxu0
  %v160 = vpop.f32.mrb[0].mxu0
  %v161 = vpop.f32.mrb[0].mxu0
  %162 = vdwg.mxu0
  %163 = vst [vmem:[%s5] sm:$0xff] %v158
  // Predicated region
  $region22: #{lora_vit_forward.23} parent=0 // pred_check
    _
  $region23: #{lora_vit_forward.23} parent=0 // pred_check_branch
    %165 = sbr.rel (0) target = $region25
  $region24: #{lora_vit_forward.23} parent=0 // pred_region
    _
  $region25: #{lora_vit_forward.23} parent=0 // pred_fallthru
    _
  // Predicated region
  $region26: #{lora_vit_forward.23} parent=0 // pred_check
    _
  $region27: #{lora_vit_forward.23} parent=0 // pred_check_branch
    %167 = sbr.rel (0) target = $region29
  $region28: #{lora_vit_forward.23} parent=0 // pred_region
    _
  $region29: #{lora_vit_forward.23} parent=0 // pred_fallthru
    _

</llo_original>
